<compile_context>
chip_gen: v6e
topology: v6e:2x2x1
jax: 0.10.0
libtpu: 0.0.40
codegen_flags: <defaults>
</compile_context>

<pallas_src>
import functools

import jax
import jax.numpy as jnp
from jax import lax
from jax.experimental import pallas as pl
from jax.experimental.pallas import tpu as pltpu


def _fused_attn_kernel(x_ref, wq_ref, wkv_ref, wp_ref, bp_ref, o_ref,
                       kv_ref, q_ref, acc_ref, *,
                       num_heads, head_dim, block_q, compute_dtype):
    """Grid = (batch, num_query_tiles); one (batch row, query tile) per step.

    x_ref   : (1, L, C)   full-sequence activations for this batch row
                          (constant block index along the query-tile axis, so
                          it stays VMEM-resident across query tiles).
    wq_ref  : (C, C)      q projection weight, PyTorch (out, in) layout,
                          pre-scaled by head_dim**-0.5 in the wrapper.
    wkv_ref : (2C, C)     [k; v] projection weight, (out, in) layout.
    wp_ref  : (C, C)      output projection weight, (out, in) layout.
    bp_ref  : (1, C)      output projection bias (f32).
    o_ref   : (1, TQ, C)  output tile.
    kv_ref  : (L, 2C)     VMEM scratch, [k | v] for the whole sequence
                          (head-major inside each half); computed once per
                          batch row (query-tile 0) and reused by later tiles.
    q_ref   : (TQ, C)     VMEM scratch, q for this query tile (head-major).
    acc_ref : (TQ, C)     VMEM scratch, lane-dense attention output.
    """
    C = num_heads * head_dim
    qi = pl.program_id(1)

    # --- K/V projection for the whole sequence: once per batch row. ----------
    @pl.when(qi == 0)
    def _():
        kv = lax.dot_general(                       # (L, 2C); (out,in) weight,
            x_ref[0], wkv_ref[...],                 # contracted via ((1,),(1,))
            dimension_numbers=(((1,), (1,)), ((), ())),
            preferred_element_type=jnp.float32)
        kv_ref[...] = kv.astype(kv_ref.dtype)

    # --- Q projection for this query tile (scale already folded into Wq). ----
    row = pl.multiple_of(qi * block_q, block_q)
    x_tile = x_ref[0, pl.ds(row, block_q), :]        # (TQ, C)
    q = lax.dot_general(
        x_tile, wq_ref[...],
        dimension_numbers=(((1,), (1,)), ((), ())),
        preferred_element_type=jnp.float32)          # (TQ, C)
    q_ref[...] = q.astype(q_ref.dtype)

    # --- Per-head softmax attention (statically unrolled). -------------------
    def one_head(col_q, col_v):
        qh = q_ref[:, pl.ds(col_q, head_dim)]        # (TQ, D)
        kh = kv_ref[:, pl.ds(col_q, head_dim)]       # (L,  D)
        vh = kv_ref[:, pl.ds(col_v, head_dim)]       # (L,  D)
        s = lax.dot_general(                         # (TQ, L) = q @ k^T, f32
            qh, kh, dimension_numbers=(((1,), (1,)), ((), ())),
            preferred_element_type=jnp.float32)
        m = jnp.max(s, axis=-1, keepdims=True)
        # exp in compute dtype (bf16 on v6e/v7x: 2x EUP rate, half the vregs);
        # the denominator accumulates in f32.
        p = jnp.exp((s - m).astype(compute_dtype))   # (TQ, L)
        denom = jnp.sum(p.astype(jnp.float32), axis=-1, keepdims=True)
        pv = lax.dot_general(                        # (TQ, D), f32 accumulate
            p, vh, dimension_numbers=(((1,), (0,)), ((), ())),
            preferred_element_type=jnp.float32)
        # Normalization folded into the (TQ, D) output instead of the (TQ, L)
        # probabilities; reciprocal runs on the otherwise-idle EUP slot.
        pv = pv * pl.reciprocal(denom, approx=True)
        acc_ref[:, pl.ds(col_q, head_dim)] = pv.astype(acc_ref.dtype)

    # TODO(synk): for very large num_heads, switch this static unroll to a
    # lax.fori_loop over a head-major (H, L, D) scratch layout to bound vreg
    # live ranges; and group heads into >=128-lane slabs so the q/k/v slices
    # and acc stores are lane-aligned (unmasked vst) when head_dim < 128.
    for h in range(num_heads):
        one_head(h * head_dim, C + h * head_dim)

    # --- Output projection (bias added in f32), lane-dense output tile. ------
    out = lax.dot_general(
        acc_ref[...], wp_ref[...],
        dimension_numbers=(((1,), (1,)), ((), ())),
        preferred_element_type=jnp.float32) + bp_ref[...]
    o_ref[0] = out.astype(o_ref.dtype)


def attention_forward(x, w_qkv, w_proj, b_proj, num_heads, *,
                      block_q=128, compute_dtype=jnp.bfloat16):
    """x: (B, L, C); weights in PyTorch nn.Linear (out_features, in_features) layout.

    compute_dtype controls the MXU operand / VMEM scratch dtype.  bf16 (default)
    targets the v6e/v7x full-rate MXU path and halves the scratch footprint;
    pass jnp.float32 on v5e or when exact f32 numerics are required.  Softmax
    statistics and all matmul accumulation stay in f32 either way.
    """
    B, L, C = x.shape
    assert C % num_heads == 0, "dim must be divisible by num_heads"
    D = C // num_heads
    scale = D ** (-0.5)
    cd = jnp.dtype(compute_dtype)

    # Query-tile size: requested block_q if it evenly divides L (and is a
    # multiple of 8), otherwise fall back to the full sequence.
    tq = block_q if (block_q <= L and L % block_q == 0) else L
    if tq != L and tq % 8 != 0:
        tq = L
    n_q = L // tq
    # TODO(synk): pad/mask ragged L instead of falling back to tq = L.

    # Pre-scale the q rows of Wqkv once (removes the (TQ, L) * scale in-kernel)
    # and split q / kv so K,V can be projected once per batch row.
    w_q = (w_qkv[:C] * scale).astype(cd)
    w_kv = w_qkv[C:].astype(cd)
    w_p = w_proj.astype(cd)
    b_p = b_proj.reshape(1, C).astype(jnp.float32)
    xc = x.astype(cd)

    # Advisory cost estimate so XLA schedules neighbours around the fused call.
    flops = 2 * B * L * C * (4 * C) + 4 * B * L * L * C
    transcendentals = B * num_heads * L * L
    bytes_accessed = int(xc.nbytes + w_q.nbytes + w_kv.nbytes + w_p.nbytes
                         + b_p.nbytes + B * L * C * x.dtype.itemsize)

    # Explicit VMEM budget: double-buffered x / out blocks, single-buffered
    # (unblocked) resident weights, plus kv / q / acc scratch.
    cdb = cd.itemsize
    vmem_est = (2 * L * C * cdb + 2 * tq * C * x.dtype.itemsize
                + 4 * C * C * cdb + 4 * C
                + (2 * L * C + 2 * tq * C) * cdb)
    vmem_limit = int(min(64 * 1024 * 1024,
                         max(32 * 1024 * 1024, (vmem_est * 5) // 4)))

    kern = functools.partial(_fused_attn_kernel, num_heads=num_heads,
                             head_dim=D, block_q=tq, compute_dtype=cd)

    return pl.pallas_call(
        kern,
        out_shape=jax.ShapeDtypeStruct((B, L, C), x.dtype),
        grid_spec=pltpu.PrefetchScalarGridSpec(
            num_scalar_prefetch=0,
            grid=(B, n_q),
            in_specs=[
                # Full-sequence x for this batch row; constant block index along
                # the query-tile axis -> stays resident across tiles.
                pl.BlockSpec((1, L, C), lambda b, q: (b, 0, 0)),
                # Weights / bias: whole-array VMEM residents (no grid blocking,
                # hence fetched once and not double-buffered).
                pl.BlockSpec(memory_space=pltpu.MemorySpace.VMEM),
                pl.BlockSpec(memory_space=pltpu.MemorySpace.VMEM),
                pl.BlockSpec(memory_space=pltpu.MemorySpace.VMEM),
                pl.BlockSpec(memory_space=pltpu.MemorySpace.VMEM),
            ],
            out_specs=pl.BlockSpec((1, tq, C), lambda b, q: (b, q, 0)),
            scratch_shapes=[
                pltpu.VMEM((L, 2 * C), cd),   # [k | v] for the whole sequence
                pltpu.VMEM((tq, C), cd),      # q for the current tile
                pltpu.VMEM((tq, C), cd),      # attention output (lane-dense)
            ],
        ),
        compiler_params=pltpu.CompilerParams(
            dimension_semantics=("parallel", "arbitrary"),
            vmem_limit_bytes=vmem_limit),
        cost_estimate=pl.CostEstimate(flops=flops,
                                      transcendentals=transcendentals,
                                      bytes_accessed=bytes_accessed),
    )(xc, w_q, w_kv, w_p, b_p)


def _ref_attention(x, w_qkv, w_proj, b_proj, num_heads):
    """Pure-JAX reference: the PyTorch 'math' path in eval mode (dropout = id)."""
    B, L, C = x.shape
    D = C // num_heads
    qkv = x @ w_qkv.T                                                   # (B,L,3C)
    qkv = qkv.reshape(B, L, 3, num_heads, D).transpose(2, 0, 3, 1, 4)   # K B H L D
    q, k, v = qkv[0], qkv[1], qkv[2]
    attn = jax.nn.softmax(
        jnp.einsum("bhqd,bhkd->bhqk", q, k) * D ** (-0.5), axis=-1)
    o = jnp.einsum("bhqk,bhkd->bhqd", attn, v)
    o = o.transpose(0, 2, 1, 3).reshape(B, L, C)
    return o @ w_proj.T + b_proj


if __name__ == "__main__":
    root = jax.random.PRNGKey(0)

    def run_case(key, B, L, C, H, compute_dtype, block_q, atol, rtol):
        kx, k1, k2, k3 = jax.random.split(key, 4)
        s = 1.0 / (C ** 0.5)
        x = jax.random.normal(kx, (B, L, C), jnp.float32)
        w_qkv = jax.random.uniform(k1, (3 * C, C), jnp.float32, -s, s)
        w_proj = jax.random.uniform(k2, (C, C), jnp.float32, -s, s)
        b_proj = jax.random.uniform(k3, (C,), jnp.float32, -s, s)

        out = attention_forward(x, w_qkv, w_proj, b_proj, H,
                                block_q=block_q, compute_dtype=compute_dtype)
        out = jax.block_until_ready(out)
        expected = _ref_attention(x, w_qkv, w_proj, b_proj, H)
        assert out.shape == (B, L, C)
        err = float(jnp.max(jnp.abs(out - expected)))
        assert jnp.allclose(out, expected, atol=atol, rtol=rtol), (
            f"max |err| = {err} for case {(B, L, C, H, str(compute_dtype), block_q)}")

    keys = jax.random.split(root, 3)
    # f32 compute path (exact apart from the ~1e-4 approx reciprocal).
    run_case(keys[0], 2, 16, 32, 4, jnp.float32, 128, 2e-3, 2e-3)
    # bf16 MXU / bf16-exp fast path (v6e/v7x); accumulation stays f32.
    run_case(keys[1], 2, 16, 32, 4, jnp.bfloat16, 128, 5e-2, 5e-2)
    # Multi-query-tile path: grid (1, 4); K/V scratch reused across tiles.
    run_case(keys[2], 1, 32, 64, 8, jnp.float32, 8, 2e-3, 2e-3)

    print("KERNEL_OK")
</pallas_src>

<mosaic_0001>
module attributes {stable_mosaic.version = 11 : i64} {
  func.func @_fused_attn_kernel(%arg0: i32, %arg1: i32, %arg2: memref<1x16x32xf32, #tpu.memory_space<vmem>>, %arg3: memref<32x32xf32, #tpu.memory_space<vmem>>, %arg4: memref<64x32xf32, #tpu.memory_space<vmem>>, %arg5: memref<32x32xf32, #tpu.memory_space<vmem>>, %arg6: memref<1x32xf32, #tpu.memory_space<vmem>>, %arg7: memref<1x16x32xf32, #tpu.memory_space<vmem>>, %arg8: memref<16x64xf32, #tpu.memory_space<vmem>>, %arg9: memref<16x32xf32, #tpu.memory_space<vmem>>, %arg10: memref<16x32xf32, #tpu.memory_space<vmem>>) attributes {dimension_semantics = [#tpu.dimension_semantics<parallel>, #tpu.dimension_semantics<arbitrary>], iteration_bounds = array<i64: 2, 1>, scalar_prefetch = 0 : i64, scratch_operands = 3 : i64, tpu.core_type = #tpu.core_type<tc>, window_params = [{transform_indices = @transform_0, window_bounds = array<i64: 1, 16, 32>}, {pipeline_mode = #tpu.pipeline_mode<synchronous>, transform_indices = @transform_1, window_bounds = array<i64: 32, 32>}, {pipeline_mode = #tpu.pipeline_mode<synchronous>, transform_indices = @transform_2, window_bounds = array<i64: 64, 32>}, {pipeline_mode = #tpu.pipeline_mode<synchronous>, transform_indices = @transform_3, window_bounds = array<i64: 32, 32>}, {pipeline_mode = #tpu.pipeline_mode<synchronous>, transform_indices = @transform_4, window_bounds = array<i64: 1, 32>}, {transform_indices = @transform_5, window_bounds = array<i64: 1, 16, 32>}]} {
    %c0_i32 = arith.constant 0 : i32
    %0 = arith.cmpi eq, %arg1, %c0_i32 : i32
    %1 = arith.extui %0 : i1 to i32
    %c0_i32_0 = arith.constant 0 : i32
    %2 = arith.cmpi ne, %1, %c0_i32_0 : i32
    scf.if %2 {
      %c0_57 = arith.constant 0 : index
      %c0_58 = arith.constant 0 : index
      %c0_59 = arith.constant 0 : index
      %84 = vector.load %arg2[%c0_57, %c0_58, %c0_59] : memref<1x16x32xf32, #tpu.memory_space<vmem>>, vector<1x16x32xf32>
      %85 = vector.shape_cast %84 : vector<1x16x32xf32> to vector<16x32xf32>
      %c0_60 = arith.constant 0 : index
      %c0_61 = arith.constant 0 : index
      %86 = vector.load %arg4[%c0_60, %c0_61] : memref<64x32xf32, #tpu.memory_space<vmem>>, vector<64x32xf32>
      %cst_62 = arith.constant dense<0.000000e+00> : vector<16x64xf32>
      %87 = tpu.matmul %85, %86, %cst_62 {dimension_numbers = #tpu.dot_dimension_numbers<[1], [1], [0], [0], [0, 0, 1, 0], [], []>} : vector<16x32xf32>, vector<64x32xf32>, vector<16x64xf32> -> vector<16x64xf32>
      %c0_63 = arith.constant 0 : index
      %c0_64 = arith.constant 0 : index
      %88 = vector.load %arg8[%c0_63, %c0_64] : memref<16x64xf32, #tpu.memory_space<vmem>>, vector<16x64xf32>
      tpu.vector_store %arg8[%c0_63, %c0_64], %87 {strides = array<i32>} : memref<16x64xf32, #tpu.memory_space<vmem>>, vector<16x64xf32>,
    } else {
    }
    %c16_i32 = arith.constant 16 : i32
    %3 = arith.muli %arg1, %c16_i32 : i32
    %4 = tpu.assume_multiple %3, 16 : i32
    %c0 = arith.constant 0 : index
    %5 = arith.index_cast %4 : i32 to index
    %c0_1 = arith.constant 0 : index
    %6 = vector.load %arg2[%c0, %5, %c0_1] : memref<1x16x32xf32, #tpu.memory_space<vmem>>, vector<1x16x32xf32>
    %7 = vector.shape_cast %6 : vector<1x16x32xf32> to vector<16x32xf32>
    %c0_2 = arith.constant 0 : index
    %c0_3 = arith.constant 0 : index
    %8 = vector.load %arg3[%c0_2, %c0_3] : memref<32x32xf32, #tpu.memory_space<vmem>>, vector<32x32xf32>
    %cst = arith.constant dense<0.000000e+00> : vector<16x32xf32>
    %9 = tpu.matmul %7, %8, %cst {dimension_numbers = #tpu.dot_dimension_numbers<[1], [1], [0], [0], [0, 0, 1, 0], [], []>} : vector<16x32xf32>, vector<32x32xf32>, vector<16x32xf32> -> vector<16x32xf32>
    %c0_4 = arith.constant 0 : index
    %c0_5 = arith.constant 0 : index
    %10 = vector.load %arg9[%c0_4, %c0_5] : memref<16x32xf32, #tpu.memory_space<vmem>>, vector<16x32xf32>
    tpu.vector_store %arg9[%c0_4, %c0_5], %9 {strides = array<i32>} : memref<16x32xf32, #tpu.memory_space<vmem>>, vector<16x32xf32>,
    %c0_6 = arith.constant 0 : index
    %c0_7 = arith.constant 0 : index
    %11 = vector.load %arg9[%c0_6, %c0_7] : memref<16x32xf32, #tpu.memory_space<vmem>>, vector<16x8xf32>
    %c0_8 = arith.constant 0 : index
    %c0_9 = arith.constant 0 : index
    %12 = vector.load %arg8[%c0_8, %c0_9] : memref<16x64xf32, #tpu.memory_space<vmem>>, vector<16x8xf32>
    %c0_10 = arith.constant 0 : index
    %c32 = arith.constant 32 : index
    %13 = vector.load %arg8[%c0_10, %c32] : memref<16x64xf32, #tpu.memory_space<vmem>>, vector<16x8xf32>
    %cst_11 = arith.constant dense<0.000000e+00> : vector<16x16xf32>
    %14 = tpu.matmul %11, %12, %cst_11 {dimension_numbers = #tpu.dot_dimension_numbers<[1], [1], [0], [0], [0, 0, 1, 0], [], []>} : vector<16x8xf32>, vector<16x8xf32>, vector<16x16xf32> -> vector<16x16xf32>
    %cst_12 = arith.constant dense<0xFF800000> : vector<16xf32>
    %15 = vector.multi_reduction <maximumf>, %14, %cst_12 [1] : vector<16x16xf32> to vector<16xf32>
    %16 = vector.shape_cast %15 : vector<16xf32> to vector<16x1xf32>
    %17 = vector.broadcast %16 : vector<16x1xf32> to vector<16x16xf32>
    %18 = arith.subf %14, %17 : vector<16x16xf32>
    %19 = math.exp %18 : vector<16x16xf32>
    %cst_13 = arith.constant dense<0.000000e+00> : vector<16xf32>
    %20 = vector.multi_reduction <add>, %19, %cst_13 [1] : vector<16x16xf32> to vector<16xf32>
    %21 = vector.shape_cast %20 : vector<16xf32> to vector<16x1xf32>
    %cst_14 = arith.constant dense<0.000000e+00> : vector<16x8xf32>
    %22 = tpu.matmul %19, %13, %cst_14 {dimension_numbers = #tpu.dot_dimension_numbers<[1], [0], [0], [1], [0, 0, 1, 1], [], []>} : vector<16x16xf32>, vector<16x8xf32>, vector<16x8xf32> -> vector<16x8xf32>
    %23 = tpu.reciprocal %21 {approx = true} : vector<16x1xf32> -> vector<16x1xf32>
    %24 = vector.broadcast %23 : vector<16x1xf32> to vector<16x8xf32>
    %25 = arith.mulf %22, %24 : vector<16x8xf32>
    %c0_15 = arith.constant 0 : index
    %c0_16 = arith.constant 0 : index
    %26 = vector.load %arg10[%c0_15, %c0_16] : memref<16x32xf32, #tpu.memory_space<vmem>>, vector<16x8xf32>
    tpu.vector_store %arg10[%c0_15, %c0_16], %25 {strides = array<i32>} : memref<16x32xf32, #tpu.memory_space<vmem>>, vector<16x8xf32>,
    %c0_17 = arith.constant 0 : index
    %c8 = arith.constant 8 : index
    %27 = vector.load %arg9[%c0_17, %c8] : memref<16x32xf32, #tpu.memory_space<vmem>>, vector<16x8xf32>
    %c0_18 = arith.constant 0 : index
    %c8_19 = arith.constant 8 : index
    %28 = vector.load %arg8[%c0_18, %c8_19] : memref<16x64xf32, #tpu.memory_space<vmem>>, vector<16x8xf32>
    %c0_20 = arith.constant 0 : index
    %c40 = arith.constant 40 : index
    %29 = vector.load %arg8[%c0_20, %c40] : memref<16x64xf32, #tpu.memory_space<vmem>>, vector<16x8xf32>
    %cst_21 = arith.constant dense<0.000000e+00> : vector<16x16xf32>
    %30 = tpu.matmul %27, %28, %cst_21 {dimension_numbers = #tpu.dot_dimension_numbers<[1], [1], [0], [0], [0, 0, 1, 0], [], []>} : vector<16x8xf32>, vector<16x8xf32>, vector<16x16xf32> -> vector<16x16xf32>
    %cst_22 = arith.constant dense<0xFF800000> : vector<16xf32>
    %31 = vector.multi_reduction <maximumf>, %30, %cst_22 [1] : vector<16x16xf32> to vector<16xf32>
    %32 = vector.shape_cast %31 : vector<16xf32> to vector<16x1xf32>
    %33 = vector.broadcast %32 : vector<16x1xf32> to vector<16x16xf32>
    %34 = arith.subf %30, %33 : vector<16x16xf32>
    %35 = math.exp %34 : vector<16x16xf32>
    %cst_23 = arith.constant dense<0.000000e+00> : vector<16xf32>
    %36 = vector.multi_reduction <add>, %35, %cst_23 [1] : vector<16x16xf32> to vector<16xf32>
    %37 = vector.shape_cast %36 : vector<16xf32> to vector<16x1xf32>
    %cst_24 = arith.constant dense<0.000000e+00> : vector<16x8xf32>
    %38 = tpu.matmul %35, %29, %cst_24 {dimension_numbers = #tpu.dot_dimension_numbers<[1], [0], [0], [1], [0, 0, 1, 1], [], []>} : vector<16x16xf32>, vector<16x8xf32>, vector<16x8xf32> -> vector<16x8xf32>
    %39 = tpu.reciprocal %37 {approx = true} : vector<16x1xf32> -> vector<16x1xf32>
    %40 = vector.broadcast %39 : vector<16x1xf32> to vector<16x8xf32>
    %41 = arith.mulf %38, %40 : vector<16x8xf32>
    %c0_25 = arith.constant 0 : index
    %c8_26 = arith.constant 8 : index
    %42 = vector.load %arg10[%c0_25, %c8_26] : memref<16x32xf32, #tpu.memory_space<vmem>>, vector<16x8xf32>
    tpu.vector_store %arg10[%c0_25, %c8_26], %41 {strides = array<i32>} : memref<16x32xf32, #tpu.memory_space<vmem>>, vector<16x8xf32>,
    %c0_27 = arith.constant 0 : index
    %c16 = arith.constant 16 : index
    %43 = vector.load %arg9[%c0_27, %c16] : memref<16x32xf32, #tpu.memory_space<vmem>>, vector<16x8xf32>
    %c0_28 = arith.constant 0 : index
    %c16_29 = arith.constant 16 : index
    %44 = vector.load %arg8[%c0_28, %c16_29] : memref<16x64xf32, #tpu.memory_space<vmem>>, vector<16x8xf32>
    %c0_30 = arith.constant 0 : index
    %c48 = arith.constant 48 : index
    %45 = vector.load %arg8[%c0_30, %c48] : memref<16x64xf32, #tpu.memory_space<vmem>>, vector<16x8xf32>
    %cst_31 = arith.constant dense<0.000000e+00> : vector<16x16xf32>
    %46 = tpu.matmul %43, %44, %cst_31 {dimension_numbers = #tpu.dot_dimension_numbers<[1], [1], [0], [0], [0, 0, 1, 0], [], []>} : vector<16x8xf32>, vector<16x8xf32>, vector<16x16xf32> -> vector<16x16xf32>
    %cst_32 = arith.constant dense<0xFF800000> : vector<16xf32>
    %47 = vector.multi_reduction <maximumf>, %46, %cst_32 [1] : vector<16x16xf32> to vector<16xf32>
    %48 = vector.shape_cast %47 : vector<16xf32> to vector<16x1xf32>
    %49 = vector.broadcast %48 : vector<16x1xf32> to vector<16x16xf32>
    %50 = arith.subf %46, %49 : vector<16x16xf32>
    %51 = math.exp %50 : vector<16x16xf32>
    %cst_33 = arith.constant dense<0.000000e+00> : vector<16xf32>
    %52 = vector.multi_reduction <add>, %51, %cst_33 [1] : vector<16x16xf32> to vector<16xf32>
    %53 = vector.shape_cast %52 : vector<16xf32> to vector<16x1xf32>
    %cst_34 = arith.constant dense<0.000000e+00> : vector<16x8xf32>
    %54 = tpu.matmul %51, %45, %cst_34 {dimension_numbers = #tpu.dot_dimension_numbers<[1], [0], [0], [1], [0, 0, 1, 1], [], []>} : vector<16x16xf32>, vector<16x8xf32>, vector<16x8xf32> -> vector<16x8xf32>
    %55 = tpu.reciprocal %53 {approx = true} : vector<16x1xf32> -> vector<16x1xf32>
    %56 = vector.broadcast %55 : vector<16x1xf32> to vector<16x8xf32>
    %57 = arith.mulf %54, %56 : vector<16x8xf32>
    %c0_35 = arith.constant 0 : index
    %c16_36 = arith.constant 16 : index
    %58 = vector.load %arg10[%c0_35, %c16_36] : memref<16x32xf32, #tpu.memory_space<vmem>>, vector<16x8xf32>
    tpu.vector_store %arg10[%c0_35, %c16_36], %57 {strides = array<i32>} : memref<16x32xf32, #tpu.memory_space<vmem>>, vector<16x8xf32>,
    %c0_37 = arith.constant 0 : index
    %c24 = arith.constant 24 : index
    %59 = vector.load %arg9[%c0_37, %c24] : memref<16x32xf32, #tpu.memory_space<vmem>>, vector<16x8xf32>
    %c0_38 = arith.constant 0 : index
    %c24_39 = arith.constant 24 : index
    %60 = vector.load %arg8[%c0_38, %c24_39] : memref<16x64xf32, #tpu.memory_space<vmem>>, vector<16x8xf32>
    %c0_40 = arith.constant 0 : index
    %c56 = arith.constant 56 : index
    %61 = vector.load %arg8[%c0_40, %c56] : memref<16x64xf32, #tpu.memory_space<vmem>>, vector<16x8xf32>
    %cst_41 = arith.constant dense<0.000000e+00> : vector<16x16xf32>
    %62 = tpu.matmul %59, %60, %cst_41 {dimension_numbers = #tpu.dot_dimension_numbers<[1], [1], [0], [0], [0, 0, 1, 0], [], []>} : vector<16x8xf32>, vector<16x8xf32>, vector<16x16xf32> -> vector<16x16xf32>
    %cst_42 = arith.constant dense<0xFF800000> : vector<16xf32>
    %63 = vector.multi_reduction <maximumf>, %62, %cst_42 [1] : vector<16x16xf32> to vector<16xf32>
    %64 = vector.shape_cast %63 : vector<16xf32> to vector<16x1xf32>
    %65 = vector.broadcast %64 : vector<16x1xf32> to vector<16x16xf32>
    %66 = arith.subf %62, %65 : vector<16x16xf32>
    %67 = math.exp %66 : vector<16x16xf32>
    %cst_43 = arith.constant dense<0.000000e+00> : vector<16xf32>
    %68 = vector.multi_reduction <add>, %67, %cst_43 [1] : vector<16x16xf32> to vector<16xf32>
    %69 = vector.shape_cast %68 : vector<16xf32> to vector<16x1xf32>
    %cst_44 = arith.constant dense<0.000000e+00> : vector<16x8xf32>
    %70 = tpu.matmul %67, %61, %cst_44 {dimension_numbers = #tpu.dot_dimension_numbers<[1], [0], [0], [1], [0, 0, 1, 1], [], []>} : vector<16x16xf32>, vector<16x8xf32>, vector<16x8xf32> -> vector<16x8xf32>
    %71 = tpu.reciprocal %69 {approx = true} : vector<16x1xf32> -> vector<16x1xf32>
    %72 = vector.broadcast %71 : vector<16x1xf32> to vector<16x8xf32>
    %73 = arith.mulf %70, %72 : vector<16x8xf32>
    %c0_45 = arith.constant 0 : index
    %c24_46 = arith.constant 24 : index
    %74 = vector.load %arg10[%c0_45, %c24_46] : memref<16x32xf32, #tpu.memory_space<vmem>>, vector<16x8xf32>
    tpu.vector_store %arg10[%c0_45, %c24_46], %73 {strides = array<i32>} : memref<16x32xf32, #tpu.memory_space<vmem>>, vector<16x8xf32>,
    %c0_47 = arith.constant 0 : index
    %c0_48 = arith.constant 0 : index
    %75 = vector.load %arg10[%c0_47, %c0_48] : memref<16x32xf32, #tpu.memory_space<vmem>>, vector<16x32xf32>
    %c0_49 = arith.constant 0 : index
    %c0_50 = arith.constant 0 : index
    %76 = vector.load %arg5[%c0_49, %c0_50] : memref<32x32xf32, #tpu.memory_space<vmem>>, vector<32x32xf32>
    %cst_51 = arith.constant dense<0.000000e+00> : vector<16x32xf32>
    %77 = tpu.matmul %75, %76, %cst_51 {dimension_numbers = #tpu.dot_dimension_numbers<[1], [1], [0], [0], [0, 0, 1, 0], [], []>} : vector<16x32xf32>, vector<32x32xf32>, vector<16x32xf32> -> vector<16x32xf32>
    %c0_52 = arith.constant 0 : index
    %c0_53 = arith.constant 0 : index
    %78 = vector.load %arg6[%c0_52, %c0_53] : memref<1x32xf32, #tpu.memory_space<vmem>>, vector<1x32xf32>
    %79 = vector.broadcast %78 : vector<1x32xf32> to vector<16x32xf32>
    %80 = arith.addf %77, %79 : vector<16x32xf32>
    %c0_54 = arith.constant 0 : index
    %c0_55 = arith.constant 0 : index
    %c0_56 = arith.constant 0 : index
    %81 = vector.load %arg7[%c0_54, %c0_55, %c0_56] : memref<1x16x32xf32, #tpu.memory_space<vmem>>, vector<1x16x32xf32>
    %82 = vector.shape_cast %81 : vector<1x16x32xf32> to vector<16x32xf32>
    %83 = vector.shape_cast %80 : vector<16x32xf32> to vector<1x16x32xf32>
    tpu.vector_store %arg7[%c0_54, %c0_55, %c0_56], %83 {strides = array<i32>} : memref<1x16x32xf32, #tpu.memory_space<vmem>>, vector<1x16x32xf32>,
    return
  }
  func.func @transform_0(%arg0: i32, %arg1: i32) -> (i32, i32, i32) {
    %c0_i32 = arith.constant 0 : i32
    %c0_i32_0 = arith.constant 0 : i32
    %c0_i32_1 = arith.constant 0 : i32
    return %arg0, %c0_i32, %c0_i32_0 : i32, i32, i32
  }
  func.func @transform_1(%arg0: i32, %arg1: i32) -> (i32, i32) {
    %c0_i32 = arith.constant 0 : i32
    %c0_i32_0 = arith.constant 0 : i32
    %c0_i32_1 = arith.constant 0 : i32
    return %c0_i32, %c0_i32_0 : i32, i32
  }
  func.func @transform_2(%arg0: i32, %arg1: i32) -> (i32, i32) {
    %c0_i32 = arith.constant 0 : i32
    %c0_i32_0 = arith.constant 0 : i32
    %c0_i32_1 = arith.constant 0 : i32
    return %c0_i32, %c0_i32_0 : i32, i32
  }
  func.func @transform_3(%arg0: i32, %arg1: i32) -> (i32, i32) {
    %c0_i32 = arith.constant 0 : i32
    %c0_i32_0 = arith.constant 0 : i32
    %c0_i32_1 = arith.constant 0 : i32
    return %c0_i32, %c0_i32_0 : i32, i32
  }
  func.func @transform_4(%arg0: i32, %arg1: i32) -> (i32, i32) {
    %c0_i32 = arith.constant 0 : i32
    %c0_i32_0 = arith.constant 0 : i32
    %c0_i32_1 = arith.constant 0 : i32
    return %c0_i32, %c0_i32_0 : i32, i32
  }
  func.func @transform_5(%arg0: i32, %arg1: i32) -> (i32, i32, i32) {
    %c0_i32 = arith.constant 0 : i32
    %c0_i32_0 = arith.constant 0 : i32
    return %arg0, %arg1, %c0_i32 : i32, i32, i32
  }
}

</mosaic_0001>

<llo_original>
// kernel: tpu_custom_call.1
$region0: #{tpu_custom_call.1}
  #allocation0 [shape = 'u32[]', space=smem, size = 0x4, offset = 0x4, fixed_abs, tag = 'smem constant byte address 0x4 - core index']
  #allocation1 [shape = 'u32[144,128]{1,0:T(1,128)}', space=vmem, size = 0x12000, scoped, tag = 'internal scratch']
  #allocation2 [shape = 'f32[16,64]{1,0:T(8,128)}', space=vmem, size = 0x2000, scoped, tag = 'scratch operand']
  #allocation3 [shape = 'f32[16,32]{1,0:T(8,128)}', space=vmem, size = 0x2000, scoped, tag = 'scratch operand']
  #allocation4 [shape = 'f32[16,32]{1,0:T(8,128)}', space=vmem, size = 0x2000, scoped, tag = 'scratch operand']
  %s0 = inlined_call_operand.vmem [shape: f32[2,16,32], index: 0, kind: input, shape index: {}]
  %s1 = inlined_call_operand.vmem [shape: f32[32,32], index: 1, kind: input, shape index: {}]
  %s2 = inlined_call_operand.vmem [shape: f32[64,32], index: 2, kind: input, shape index: {}]
  %s3 = inlined_call_operand.vmem [shape: f32[32,32], index: 3, kind: input, shape index: {}]
  %s4 = inlined_call_operand.vmem [shape: f32[1,32], index: 4, kind: input, shape index: {}]
  %s5 = inlined_call_operand.hbm [shape: f32[2,16,32], index: 5, kind: output, shape index: {}]
  %s6 = sld [smem:[#allocation0]]
  $region57: #{tpu_custom_call.1} parent=0
    _
  %s8 = ssub.s32 1, %s6
  %s9 = scalar_select 0, %s8, %s6
  $region1: #{tpu_custom_call.1} parent=0
    #allocation5 [shape = 'u8[16384]{0}', space=vmem, size = 0x4000, scoped, tag = 'output window, operand 0']
    #allocation6 [shape = 's32[2]{0}', space=sflag, size = 0x8, scoped, tag = 'scoped memory for tpu_custom_call.1']
    %10 = vsyncpa [#allocation6], 0
    %s11 = scalar_lea.sflag [#allocation6], 1
    %12 = vsyncpa %s11, 0
    loop: start=0, step=1, limit=4
    $region2: #{tpu_custom_call.1} parent=1 // loop_pre_header
      _
    $region3: #{tpu_custom_call.1} parent=1 // loop_header
      %s14 = sphi 0, %s18
      %p15 = scmp.ge.s32.totalorder %s14, 4
      %s21 = sphi 0, %s33
      %s22 = sphi 0, %s29
      %s23 = sphi 0, %s21
      %s24 = sphi 0, %s22
      %s25 = sphi 0, %s23
      %s26 = sphi 0, %s24
      %s36 = sphi 0, %s38
      %s39 = sphi 0, %s36
      %s40 = sphi 0, %s39
      %s56 = sphi 0, %s40
      %s60 = sphi 0, %s60
      %s62 = sphi 0, %s60
      %s63 = sphi 0, %s62
      %s77 = sphi 0, %s63
      %s81 = sphi 0, %s81
      %s83 = sphi 0, %s81
      %s84 = sphi 0, %s83
      %s98 = sphi 0, %s84
      %s102 = sphi 0, %s102
      %s104 = sphi 0, %s102
      %s105 = sphi 0, %s104
      %s119 = sphi 0, %s105
      %s123 = sphi 0, %s123
      %s125 = sphi 0, %s123
      %s126 = sphi 0, %s125
      %s140 = sphi 0, %s126
      %s148 = sphi 0, %s150
      %s151 = sphi 0, %s148
      %s152 = sphi 0, %s151
      %s168 = sphi 0, %s152
    $region4: #{tpu_custom_call.1} parent=1 // loop_header_branch
      %17 = sbr.rel (%p15) target = $region8
    $region5: #{tpu_custom_call.1} parent=1 // loop_body
      %s19 = ssub.s32 %s14, 1
      %s20 = ssub.s32 %s14, 2
      %s27 = sadd.s32 1, %s22
      %p28 = scmp.ge.s32.totalorder %s27, 1
      %s29 = scalar_select %p28, 0, %s27
      %s30 = sadd.s32 1, %s21
      %s31 = scalar_select %p28, %s30, %s21
      %p32 = scmp.ge.s32.totalorder %s31, 2
      %s33 = scalar_select %p32, 0, %s31
      %s34 = ssub.s32 %s21, %s33
      %p35 = scmp.eq.s32.totalorder %s34, 0
      %s37 = sadd.s32 %s36, 1
      %s38 = scalar_select %p35, %s36, %s37
      %p41 = pneg %p35
      %p42 = scmp.eq.s32.totalorder %s14, 1
      %p43 = por %p41, %p42
      %p44 = scmp.ne.s32.totalorder %s36, %s39
      %p45 = scmp.eq.s32.totalorder %s14, 0
      %p46 = por %p44, %p45
      %p47 = scmp.ne.s32.totalorder %s36, %s39
      %p48 = scmp.eq.s32.totalorder %s19, 1
      %p49 = por %p47, %p48
      %p50 = scmp.ne.s32.totalorder %s39, %s40
      %p51 = scmp.eq.s32.totalorder %s19, 0
      %p52 = por %p50, %p51
      %p53 = scmp.ne.s32.totalorder %s39, %s40
      %p54 = scmp.eq.s32.totalorder %s20, 1
      %p55 = por %p53, %p54
      %p57 = scmp.ne.s32.totalorder %s40, %s56
      %p58 = scmp.eq.s32.totalorder %s20, 0
      %p59 = por %p57, %p58
      %s61 = sadd.s32 %s60, 1
      %p64 = scmp.eq.s32.totalorder %s14, 1
      %p65 = scmp.ne.s32.totalorder %s60, %s62
      %p66 = scmp.eq.s32.totalorder %s14, 0
      %p67 = por %p65, %p66
      %p68 = scmp.ne.s32.totalorder %s60, %s62
      %p69 = scmp.eq.s32.totalorder %s19, 1
      %p70 = por %p68, %p69
      %p71 = scmp.ne.s32.totalorder %s62, %s63
      %p72 = scmp.eq.s32.totalorder %s19, 0
      %p73 = por %p71, %p72
      %p74 = scmp.ne.s32.totalorder %s62, %s63
      %p75 = scmp.eq.s32.totalorder %s20, 1
      %p76 = por %p74, %p75
      %p78 = scmp.ne.s32.totalorder %s63, %s77
      %p79 = scmp.eq.s32.totalorder %s20, 0
      %p80 = por %p78, %p79
      %s82 = sadd.s32 %s81, 1
      %p85 = scmp.eq.s32.totalorder %s14, 1
      %p86 = scmp.ne.s32.totalorder %s81, %s83
      %p87 = scmp.eq.s32.totalorder %s14, 0
      %p88 = por %p86, %p87
      %p89 = scmp.ne.s32.totalorder %s81, %s83
      %p90 = scmp.eq.s32.totalorder %s19, 1
      %p91 = por %p89, %p90
      %p92 = scmp.ne.s32.totalorder %s83, %s84
      %p93 = scmp.eq.s32.totalorder %s19, 0
      %p94 = por %p92, %p93
      %p95 = scmp.ne.s32.totalorder %s83, %s84
      %p96 = scmp.eq.s32.totalorder %s20, 1
      %p97 = por %p95, %p96
      %p99 = scmp.ne.s32.totalorder %s84, %s98
      %p100 = scmp.eq.s32.totalorder %s20, 0
      %p101 = por %p99, %p100
      %s103 = sadd.s32 %s102, 1
      %p106 = scmp.eq.s32.totalorder %s14, 1
      %p107 = scmp.ne.s32.totalorder %s102, %s104
      %p108 = scmp.eq.s32.totalorder %s14, 0
      %p109 = por %p107, %p108
      %p110 = scmp.ne.s32.totalorder %s102, %s104
      %p111 = scmp.eq.s32.totalorder %s19, 1
      %p112 = por %p110, %p111
      %p113 = scmp.ne.s32.totalorder %s104, %s105
      %p114 = scmp.eq.s32.totalorder %s19, 0
      %p115 = por %p113, %p114
      %p116 = scmp.ne.s32.totalorder %s104, %s105
      %p117 = scmp.eq.s32.totalorder %s20, 1
      %p118 = por %p116, %p117
      %p120 = scmp.ne.s32.totalorder %s105, %s119
      %p121 = scmp.eq.s32.totalorder %s20, 0
      %p122 = por %p120, %p121
      %s124 = sadd.s32 %s123, 1
      %p127 = scmp.eq.s32.totalorder %s14, 1
      %p128 = scmp.ne.s32.totalorder %s123, %s125
      %p129 = scmp.eq.s32.totalorder %s14, 0
      %p130 = por %p128, %p129
      %p131 = scmp.ne.s32.totalorder %s123, %s125
      %p132 = scmp.eq.s32.totalorder %s19, 1
      %p133 = por %p131, %p132
      %p134 = scmp.ne.s32.totalorder %s125, %s126
      %p135 = scmp.eq.s32.totalorder %s19, 0
      %p136 = por %p134, %p135
      %p137 = scmp.ne.s32.totalorder %s125, %s126
      %p138 = scmp.eq.s32.totalorder %s20, 1
      %p139 = por %p137, %p138
      %p141 = scmp.ne.s32.totalorder %s126, %s140
      %p142 = scmp.eq.s32.totalorder %s20, 0
      %p143 = por %p141, %p142
      %s144 = ssub.s32 %s21, %s33
      %s145 = ssub.s32 %s22, %s29
      %s146 = sor.u32 %s144, %s145
      %p147 = scmp.eq.s32.totalorder %s146, 0
      %s149 = sadd.s32 %s148, 1
      %s150 = scalar_select %p147, %s148, %s149
      %p153 = pneg %p147
      %p154 = scmp.eq.s32.totalorder %s14, 1
      %p155 = por %p153, %p154
      %p156 = scmp.ne.s32.totalorder %s148, %s151
      %p157 = scmp.eq.s32.totalorder %s14, 0
      %p158 = por %p156, %p157
      %p159 = scmp.ne.s32.totalorder %s148, %s151
      %p160 = scmp.eq.s32.totalorder %s19, 1
      %p161 = por %p159, %p160
      %p162 = scmp.ne.s32.totalorder %s151, %s152
      %p163 = scmp.eq.s32.totalorder %s19, 0
      %p164 = por %p162, %p163
      %p165 = scmp.ne.s32.totalorder %s151, %s152
      %p166 = scmp.eq.s32.totalorder %s20, 1
      %p167 = por %p165, %p166
      %p169 = scmp.ne.s32.totalorder %s152, %s168
      %p170 = scmp.eq.s32.totalorder %s20, 0
      %p171 = por %p169, %p170
      %p172 = scmp.le.s32.totalorder 1, %s14
      %p173 = scmp.lt.s32.totalorder %s14, 3
      %p174 = pnand %p172, %p173
      %p175 = pneg %p174
      // Predicated region
      $region9: #{tpu_custom_call.1} parent=5 // pred_check
        _
      $region10: #{tpu_custom_call.1} parent=5 // pred_check_branch
        %177 = sbr.rel (%p174) target = $region12
      $region11: #{tpu_custom_call.1} parent=5 // pred_region
        %s178 = ssub.s32 %s14, 1
        // Predicated region
        $region13: #{tpu_custom_call.1} parent=11 // pred_check
          %p179 = pneg %p73
        $region14: #{tpu_custom_call.1} parent=11 // pred_check_branch
          %181 = sbr.rel (%p179) target = $region16
        $region15: #{tpu_custom_call.1} parent=11 // pred_region
          _
        $region16: #{tpu_custom_call.1} parent=11 // pred_fallthru
          _
        // Predicated region
        $region17: #{tpu_custom_call.1} parent=11 // pred_check
          %p182 = pneg %p94
        $region18: #{tpu_custom_call.1} parent=11 // pred_check_branch
          %184 = sbr.rel (%p182) target = $region20
        $region19: #{tpu_custom_call.1} parent=11 // pred_region
          _
        $region20: #{tpu_custom_call.1} parent=11 // pred_fallthru
          _
        // Predicated region
        $region21: #{tpu_custom_call.1} parent=11 // pred_check
          %p185 = pneg %p115
        $region22: #{tpu_custom_call.1} parent=11 // pred_check_branch
          %187 = sbr.rel (%p185) target = $region24
        $region23: #{tpu_custom_call.1} parent=11 // pred_region
          _
        $region24: #{tpu_custom_call.1} parent=11 // pred_fallthru
          _
        // Predicated region
        $region25: #{tpu_custom_call.1} parent=11 // pred_check
          %p188 = pneg %p136
        $region26: #{tpu_custom_call.1} parent=11 // pred_check_branch
          %190 = sbr.rel (%p188) target = $region28
        $region27: #{tpu_custom_call.1} parent=11 // pred_region
          _
        $region28: #{tpu_custom_call.1} parent=11 // pred_fallthru
          _
      $region12: #{tpu_custom_call.1} parent=5 // pred_fallthru
        _
      %p191 = scmp.lt.s32.totalorder %s14, 2
      // Predicated region
      $region29: #{tpu_custom_call.1} parent=5 // pred_check
        %p192 = pneg %p191
      $region30: #{tpu_custom_call.1} parent=5 // pred_check_branch
        %194 = sbr.rel (%p192) target = $region32
      $region31: #{tpu_custom_call.1} parent=5 // pred_region
        // Predicated region
        $region33: #{tpu_custom_call.1} parent=31 // pred_check
          %p195 = pneg %p46
        $region34: #{tpu_custom_call.1} parent=31 // pred_check_branch
          %197 = sbr.rel (%p195) target = $region36
        $region35: #{tpu_custom_call.1} parent=31 // pred_region
          %p198 = scmp.lt.s32.totalorder %s21, 1
          %s199 = scalar_select %p198, %s21, 1
          %s200 = smul.addr %s199, 2
          %s201 = smul.addr %s200, 8
          %s202 = scalar_lea.vmem %s0, %s201
        $region36: #{tpu_custom_call.1} parent=31 // pred_fallthru
          _
      $region32: #{tpu_custom_call.1} parent=5 // pred_fallthru
        _
      %p203 = scmp.le.s32.totalorder 1, %s14
      %p204 = scmp.lt.s32.totalorder %s14, 3
      %p205 = pnand %p203, %p204
      %p206 = pneg %p205
      // Predicated region
      $region37: #{tpu_custom_call.1} parent=5 // pred_check
        _
      $region38: #{tpu_custom_call.1} parent=5 // pred_check_branch
        %208 = sbr.rel (%p205) target = $region40
      $region39: #{tpu_custom_call.1} parent=5 // pred_region
        %s209 = ssub.s32 %s14, 1
        %p210 = scmp.lt.s32.totalorder %s23, 1
        %s211 = scalar_select %p210, %s23, 1
        %s212 = smul.addr %s211, 2
        %s213 = smul.addr %s212, 8
        %s214 = scalar_lea.vmem %s0, %s213
        %p215 = pneg %p52
        %p216 = pneg %p49
        %p217 = pneg %p73
        %p218 = pneg %p70
        %p219 = pneg %p94
        %p220 = pneg %p91
        %p221 = pneg %p115
        %p222 = pneg %p112
        %p223 = pneg %p136
        %p224 = pneg %p133
        %p225 = pneg %p164
        %p226 = pneg %p161
        %s227 = sand.u32 %s151, 1
        %s228 = scalar_lea.sflag [#allocation6], %s227
        %s229 = sand.u32 %s151, 1
        %s230 = smul.addr %s229, 16
        %s231 = scalar_lea.vmem [#allocation5], %s230
        %p232 = scmp.lt.s32.totalorder %s23, 1
        %s233 = scalar_select %p232, %s23, 1
        %s234 = smul.addr %s233, 2
        %s235 = smul.addr %s234, 8
        %s236 = scalar_lea.vmem %s0, %s235
        %s237 = smul.u32 2, %s24
        %p238 = scmp.eq.s32.totalorder %s24, 0
        // Predicated region
        $region41: #{tpu_custom_call.1} parent=39 // pred_check
          %p239 = pneg %p238
        $region42: #{tpu_custom_call.1} parent=39 // pred_check_branch
          %241 = sbr.rel (%p239) target = $region44
        $region43: #{tpu_custom_call.1} parent=39 // pred_region
          %v242 = vld [vmem:[%s236] sm:$0xff]
          %v243 = vld [vmem:[%s236 + $0x8] sm:$0xff]
          %v244 = vld [vmem:[%s2] sm:$0xff]
          %v245 = vld [vmem:[%s2 + $0x8] sm:$0xff]
          %v246 = vld [vmem:[%s2 + $0x10] sm:$0xff]
          %v247 = vld [vmem:[%s2 + $0x18] sm:$0xff]
          %v248 = vld [vmem:[%s2 + $0x20] sm:$0xff]
          %v249 = vld [vmem:[%s2 + $0x28] sm:$0xff]
          %v250 = vld [vmem:[%s2 + $0x30] sm:$0xff]
          %v251 = vld [vmem:[%s2 + $0x38] sm:$0xff]
          %vm252 = vcmask 261120
          %v254 = vsel %vm252, %v242, 0
          %v257 = vsel %vm252, %v243, 0
          %v260 = vsel %vm252, %v244, 0
          %v263 = vsel %vm252, %v245, 0
          %v266 = vsel %vm252, %v246, 0
          %v269 = vsel %vm252, %v247, 0
          %v272 = vsel %vm252, %v248, 0
          %v275 = vsel %vm252, %v249, 0
          %v278 = vsel %vm252, %v250, 0
          %v281 = vsel %vm252, %v251, 0
          %283 = vmatprep.subr.mxu0 0.0
          %284 = vmatpush1.xpose.msra.mxu0 0.0
          %285 = vmatprep.subr.mxu0 0.0
          %286 = vmatpush1.xpose.msra.mxu0 0.0
          %287 = vmatprep.subr.mxu0 0.0
          %288 = vmatpush1.xpose.msra.mxu0 0.0
          %289 = vmatprep.subr.mxu0 0.0
          %290 = vmatpush1.xpose.msra.mxu0 0.0
          %291 = vmatprep.subr.mxu0 0.0
          %292 = vmatpush1.xpose.msra.mxu0 0.0
          %293 = vmatprep.subr.mxu0 0.0
          %294 = vmatpush1.xpose.msra.mxu0 0.0
          %295 = vmatprep.subr.mxu0 0.0
          %296 = vmatpush1.xpose.msra.mxu0 0.0
          %297 = vmatprep.subr.mxu0 0.0
          %298 = vmatpush1.xpose.msra.mxu0 0.0
          %299 = vmatprep.subr.mxu0 0.0
          %300 = vmatpush1.xpose.msra.mxu0 %v281
          %301 = vmatprep.subr.mxu0 0.0
          %302 = vmatpush1.xpose.msra.mxu0 %v278
          %303 = vmatprep.subr.mxu0 0.0
          %304 = vmatpush1.xpose.msra.mxu0 %v275
          %305 = vmatprep.subr.mxu0 0.0
          %306 = vmatpush1.xpose.msra.mxu0 %v272
          %307 = vmatprep.subr.mxu0 0.0
          %308 = vmatpush1.xpose.msra.mxu0 %v269
          %309 = vmatprep.subr.mxu0 0.0
          %310 = vmatpush1.xpose.msra.mxu0 %v266
          %311 = vmatprep.subr.mxu0 0.0
          %312 = vmatpush1.xpose.msra.mxu0 %v263
          %313 = vmatprep.subr.mxu0 0.0
          %314 = vmatpush1.xpose.msra.mxu0 %v260
          %315 = vmatprep.subr.mxu0 0.0
          %316 = vmatpush2.xpose.msra.mxu0 0.0
          %317 = vmatprep.subr.mxu0 0.0
          %318 = vmatpush2.xpose.msra.mxu0 0.0
          %319 = vmatprep.subr.mxu0 0.0
          %320 = vmatpush2.xpose.msra.mxu0 0.0
          %321 = vmatprep.subr.mxu0 0.0
          %322 = vmatpush2.xpose.msra.mxu0 0.0
          %323 = vmatprep.subr.mxu0 0.0
          %324 = vmatpush2.xpose.msra.mxu0 0.0
          %325 = vmatprep.subr.mxu0 0.0
          %326 = vmatpush2.xpose.msra.mxu0 0.0
          %327 = vmatprep.subr.mxu0 0.0
          %328 = vmatpush2.xpose.msra.mxu0 0.0
          %329 = vmatprep.subr.mxu0 0.0
          %330 = vmatpush2.xpose.msra.mxu0 0.0
          %331 = vmatprep.subr.mxu0 0.0
          %332 = vmatpush2.xpose.msra.mxu0 0.0
          %333 = vmatprep.subr.mxu0 0.0
          %334 = vmatpush2.xpose.msra.mxu0 0.0
          %335 = vmatprep.subr.mxu0 0.0
          %336 = vmatpush2.xpose.msra.mxu0 0.0
          %337 = vmatprep.subr.mxu0 0.0
          %338 = vmatpush2.xpose.msra.mxu0 0.0
          %339 = vmatprep.subr.mxu0 0.0
          %340 = vmatpush2.xpose.msra.mxu0 0.0
          %341 = vmatprep.subr.mxu0 0.0
          %342 = vmatpush2.xpose.msra.mxu0 0.0
          %343 = vmatprep.subr.mxu0 0.0
          %344 = vmatpush2.xpose.msra.mxu0 0.0
          %345 = vmatprep.subr.mxu0 0.0
          %346 = vmatpush2.xpose.msra.mxu0 0.0
          %347 = vmatprep.mubr.f32.mxu0 0.0
          %348 = vmatmul.mubr.f32.gmra.mxu0 %v254
          %v349 = vpop.f32.mrf.mxu0
          %v350 = vadd.f32 0.0, %v349
          %v351 = vpop.f32.mrf.mxu0
          %352 = vmatprep.mubr.f32.mxu0 0.0
          %353 = vmatmul.mubr.f32.gmra.mxu0 %v257
          %v354 = vpop.f32.mrf.mxu0
          %v355 = vadd.f32 0.0, %v354
          %v356 = vpop.f32.mrf.mxu0
          %357 = vdwg.mxu0
          %vm358 = vcmask 523264
          %359 = vst.msk [vmem:[#allocation2] sm:$0xff] %vm358, %v350
          %360 = vst.msk [vmem:[#allocation2 + $0x8] sm:$0xff] %vm358, %v355
        $region44: #{tpu_custom_call.1} parent=39 // pred_fallthru
          _
        %s361 = smul.u32 %s24, 16
        %s362 = scalar_lea.vmem %s236, %s361
        %v363 = vld [vmem:[%s362] sm:$0xff]
        %v364 = vld [vmem:[%s362 + $0x8] sm:$0xff]
        %v365 = vld [vmem:[%s1] sm:$0xff]
        %v366 = vld [vmem:[%s1 + $0x8] sm:$0xff]
        %v367 = vld [vmem:[%s1 + $0x10] sm:$0xff]
        %v368 = vld [vmem:[%s1 + $0x18] sm:$0xff]
        %vm369 = vcmask 261120
        %v371 = vsel %vm369, %v363, 0
        %v374 = vsel %vm369, %v364, 0
        %v377 = vsel %vm369, %v365, 0
        %v380 = vsel %vm369, %v366, 0
        %v383 = vsel %vm369, %v367, 0
        %v386 = vsel %vm369, %v368, 0
        %388 = vmatprep.subr.mxu0 0.0
        %389 = vmatpush1.xpose.msra.mxu0 0.0
        %390 = vmatprep.subr.mxu0 0.0
        %391 = vmatpush1.xpose.msra.mxu0 0.0
        %392 = vmatprep.subr.mxu0 0.0
        %393 = vmatpush1.xpose.msra.mxu0 0.0
        %394 = vmatprep.subr.mxu0 0.0
        %395 = vmatpush1.xpose.msra.mxu0 0.0
        %396 = vmatprep.subr.mxu0 0.0
        %397 = vmatpush1.xpose.msra.mxu0 0.0
        %398 = vmatprep.subr.mxu0 0.0
        %399 = vmatpush1.xpose.msra.mxu0 0.0
        %400 = vmatprep.subr.mxu0 0.0
        %401 = vmatpush1.xpose.msra.mxu0 0.0
        %402 = vmatprep.subr.mxu0 0.0
        %403 = vmatpush1.xpose.msra.mxu0 0.0
        %404 = vmatprep.subr.mxu0 0.0
        %405 = vmatpush1.xpose.msra.mxu0 0.0
        %406 = vmatprep.subr.mxu0 0.0
        %407 = vmatpush1.xpose.msra.mxu0 0.0
        %408 = vmatprep.subr.mxu0 0.0
        %409 = vmatpush1.xpose.msra.mxu0 0.0
        %410 = vmatprep.subr.mxu0 0.0
        %411 = vmatpush1.xpose.msra.mxu0 0.0
        %412 = vmatprep.subr.mxu0 0.0
        %413 = vmatpush1.xpose.msra.mxu0 %v386
        %414 = vmatprep.subr.mxu0 0.0
        %415 = vmatpush1.xpose.msra.mxu0 %v383
        %416 = vmatprep.subr.mxu0 0.0
        %417 = vmatpush1.xpose.msra.mxu0 %v380
        %418 = vmatprep.subr.mxu0 0.0
        %419 = vmatpush1.xpose.msra.mxu0 %v377
        %420 = vmatprep.subr.mxu0 0.0
        %421 = vmatpush2.xpose.msra.mxu0 0.0
        %422 = vmatprep.subr.mxu0 0.0
        %423 = vmatpush2.xpose.msra.mxu0 0.0
        %424 = vmatprep.subr.mxu0 0.0
        %425 = vmatpush2.xpose.msra.mxu0 0.0
        %426 = vmatprep.subr.mxu0 0.0
        %427 = vmatpush2.xpose.msra.mxu0 0.0
        %428 = vmatprep.subr.mxu0 0.0
        %429 = vmatpush2.xpose.msra.mxu0 0.0
        %430 = vmatprep.subr.mxu0 0.0
        %431 = vmatpush2.xpose.msra.mxu0 0.0
        %432 = vmatprep.subr.mxu0 0.0
        %433 = vmatpush2.xpose.msra.mxu0 0.0
        %434 = vmatprep.subr.mxu0 0.0
        %435 = vmatpush2.xpose.msra.mxu0 0.0
        %436 = vmatprep.subr.mxu0 0.0
        %437 = vmatpush2.xpose.msra.mxu0 0.0
        %438 = vmatprep.subr.mxu0 0.0
        %439 = vmatpush2.xpose.msra.mxu0 0.0
        %440 = vmatprep.subr.mxu0 0.0
        %441 = vmatpush2.xpose.msra.mxu0 0.0
        %442 = vmatprep.subr.mxu0 0.0
        %443 = vmatpush2.xpose.msra.mxu0 0.0
        %444 = vmatprep.subr.mxu0 0.0
        %445 = vmatpush2.xpose.msra.mxu0 0.0
        %446 = vmatprep.subr.mxu0 0.0
        %447 = vmatpush2.xpose.msra.mxu0 0.0
        %448 = vmatprep.subr.mxu0 0.0
        %449 = vmatpush2.xpose.msra.mxu0 0.0
        %450 = vmatprep.subr.mxu0 0.0
        %451 = vmatpush2.xpose.msra.mxu0 0.0
        %452 = vmatprep.mubr.f32.mxu0 0.0
        %453 = vmatmul.mubr.f32.gmra.mxu0 %v371
        %v454 = vpop.f32.mrf.mxu0
        %v455 = vadd.f32 0.0, %v454
        %v456 = vpop.f32.mrf.mxu0
        %457 = vmatprep.mubr.f32.mxu0 0.0
        %458 = vmatmul.mubr.f32.gmra.mxu0 %v374
        %v459 = vpop.f32.mrf.mxu0
        %v460 = vadd.f32 0.0, %v459
        %v461 = vpop.f32.mrf.mxu0
        %462 = vdwg.mxu0
        %463 = vst.msk [vmem:[#allocation3] sm:$0xff] %vm369, %v455
        %464 = vst.msk [vmem:[#allocation3 + $0x8] sm:$0xff] %vm369, %v460
        %v465 = vld [vmem:[#allocation3] sm:$0xff]
        %v466 = vld [vmem:[#allocation3 + $0x8] sm:$0xff]
        %v467 = vld [vmem:[#allocation2] sm:$0xff]
        %v468 = vld [vmem:[#allocation2 + $0x8] sm:$0xff]
        %vm469 = vcmask 64512
        %v471 = vsel %vm469, %v465, 0
        %v474 = vsel %vm469, %v466, 0
        %v477 = vsel %vm469, %v467, 0
        %v480 = vsel %vm469, %v468, 0
        %482 = vmatprep.subr.mxu0 0.0
        %483 = vmatpush1.xpose.msra.mxu0 0.0
        %484 = vmatprep.subr.mxu0 0.0
        %485 = vmatpush1.xpose.msra.mxu0 0.0
        %486 = vmatprep.subr.mxu0 0.0
        %487 = vmatpush1.xpose.msra.mxu0 0.0
        %488 = vmatprep.subr.mxu0 0.0
        %489 = vmatpush1.xpose.msra.mxu0 0.0
        %490 = vmatprep.subr.mxu0 0.0
        %491 = vmatpush1.xpose.msra.mxu0 0.0
        %492 = vmatprep.subr.mxu0 0.0
        %493 = vmatpush1.xpose.msra.mxu0 0.0
        %494 = vmatprep.subr.mxu0 0.0
        %495 = vmatpush1.xpose.msra.mxu0 0.0
        %496 = vmatprep.subr.mxu0 0.0
        %497 = vmatpush1.xpose.msra.mxu0 0.0
        %498 = vmatprep.subr.mxu0 0.0
        %499 = vmatpush1.xpose.msra.mxu0 0.0
        %500 = vmatprep.subr.mxu0 0.0
        %501 = vmatpush1.xpose.msra.mxu0 0.0
        %502 = vmatprep.subr.mxu0 0.0
        %503 = vmatpush1.xpose.msra.mxu0 0.0
        %504 = vmatprep.subr.mxu0 0.0
        %505 = vmatpush1.xpose.msra.mxu0 0.0
        %506 = vmatprep.subr.mxu0 0.0
        %507 = vmatpush1.xpose.msra.mxu0 0.0
        %508 = vmatprep.subr.mxu0 0.0
        %509 = vmatpush1.xpose.msra.mxu0 0.0
        %510 = vmatprep.subr.mxu0 0.0
        %511 = vmatpush1.xpose.msra.mxu0 %v480
        %512 = vmatprep.subr.mxu0 0.0
        %513 = vmatpush1.xpose.msra.mxu0 %v477
        %514 = vmatprep.subr.mxu0 0.0
        %515 = vmatpush2.xpose.msra.mxu0 0.0
        %516 = vmatprep.subr.mxu0 0.0
        %517 = vmatpush2.xpose.msra.mxu0 0.0
        %518 = vmatprep.subr.mxu0 0.0
        %519 = vmatpush2.xpose.msra.mxu0 0.0
        %520 = vmatprep.subr.mxu0 0.0
        %521 = vmatpush2.xpose.msra.mxu0 0.0
        %522 = vmatprep.subr.mxu0 0.0
        %523 = vmatpush2.xpose.msra.mxu0 0.0
        %524 = vmatprep.subr.mxu0 0.0
        %525 = vmatpush2.xpose.msra.mxu0 0.0
        %526 = vmatprep.subr.mxu0 0.0
        %527 = vmatpush2.xpose.msra.mxu0 0.0
        %528 = vmatprep.subr.mxu0 0.0
        %529 = vmatpush2.xpose.msra.mxu0 0.0
        %530 = vmatprep.subr.mxu0 0.0
        %531 = vmatpush2.xpose.msra.mxu0 0.0
        %532 = vmatprep.subr.mxu0 0.0
        %533 = vmatpush2.xpose.msra.mxu0 0.0
        %534 = vmatprep.subr.mxu0 0.0
        %535 = vmatpush2.xpose.msra.mxu0 0.0
        %536 = vmatprep.subr.mxu0 0.0
        %537 = vmatpush2.xpose.msra.mxu0 0.0
        %538 = vmatprep.subr.mxu0 0.0
        %539 = vmatpush2.xpose.msra.mxu0 0.0
        %540 = vmatprep.subr.mxu0 0.0
        %541 = vmatpush2.xpose.msra.mxu0 0.0
        %542 = vmatprep.subr.mxu0 0.0
        %543 = vmatpush2.xpose.msra.mxu0 0.0
        %544 = vmatprep.subr.mxu0 0.0
        %545 = vmatpush2.xpose.msra.mxu0 0.0
        %546 = vmatprep.mubr.f32.mxu0 0.0
        %547 = vmatmul.mubr.f32.gmra.mxu0 %v471
        %v548 = vpop.f32.mrf.mxu0
        %v549 = vadd.f32 0.0, %v548
        %v550 = vpop.f32.mrf.mxu0
        %551 = vmatprep.mubr.f32.mxu0 0.0
        %552 = vmatmul.mubr.f32.gmra.mxu0 %v474
        %v553 = vpop.f32.mrf.mxu0
        %v554 = vadd.f32 0.0, %v553
        %v555 = vpop.f32.mrf.mxu0
        %556 = vdwg.mxu0
        %vm557 = vcmask 130048
        %v558 = vsel %vm557, %v549, -inf
        %559 = vmax.xlane.f32.xlu0 %v558
        %v560 = vpop.xlane.xlu0 %559
        %v561 = vsel %vm557, %v554, -inf
        %562 = vmax.xlane.f32.xlu0 %v561
        %v563 = vpop.xlane.xlu0 %562
        %v564 = vsub.f32 %v549, %v560
        %v565 = vsub.f32 %v554, %v563
        %v566 = vmul.f32 %v564, 1.442695
        %v567 = vpow.pop %v566
        %v568 = vmul.f32 %v565, 1.442695
        %v569 = vpow.pop %v568
        %v570 = vsel %vm557, %v567, 0.0
        %571 = vadd.xlane.f32.xlu0 %v570
        %v572 = vpop.xlane.xlu0 %571
        %v573 = vsel %vm557, %v569, 0.0
        %574 = vadd.xlane.f32.xlu0 %v573
        %v575 = vpop.xlane.xlu0 %574
        %576 = vrot.lane.b32.xlu0 %v467, 96
        %v577 = vpop.permute.xlu0 %576
        %578 = vrot.lane.b32.xlu0 %v468, 96
        %v579 = vpop.permute.xlu0 %578
        %v583 = vsel %vm557, %v567, 0
        %v586 = vsel %vm557, %v569, 0
        %588 = vmatprep.subr.mxu0 0.0
        %589 = vmatpush1.msra.mxu0 0.0
        %590 = vmatprep.subr.mxu0 0.0
        %591 = vmatpush1.msra.mxu0 0.0
        %592 = vmatprep.subr.mxu0 0.0
        %593 = vmatpush1.msra.mxu0 0.0
        %594 = vmatprep.subr.mxu0 0.0
        %595 = vmatpush1.msra.mxu0 0.0
        %596 = vmatprep.subr.mxu0 0.0
        %597 = vmatpush1.msra.mxu0 0.0
        %598 = vmatprep.subr.mxu0 0.0
        %599 = vmatpush1.msra.mxu0 0.0
        %600 = vmatprep.subr.mxu0 0.0
        %601 = vmatpush1.msra.mxu0 0.0
        %602 = vmatprep.subr.mxu0 0.0
        %603 = vmatpush1.msra.mxu0 0.0
        %604 = vmatprep.subr.mxu0 0.0
        %605 = vmatpush1.msra.mxu0 0.0
        %606 = vmatprep.subr.mxu0 0.0
        %607 = vmatpush1.msra.mxu0 0.0
        %608 = vmatprep.subr.mxu0 0.0
        %609 = vmatpush1.msra.mxu0 0.0
        %610 = vmatprep.subr.mxu0 0.0
        %611 = vmatpush1.msra.mxu0 0.0
        %612 = vmatprep.subr.mxu0 0.0
        %613 = vmatpush1.msra.mxu0 0.0
        %614 = vmatprep.subr.mxu0 0.0
        %615 = vmatpush1.msra.mxu0 0.0
        %616 = vmatprep.subr.mxu0 0.0
        %617 = vmatpush1.msra.mxu0 %v579
        %618 = vmatprep.subr.mxu0 0.0
        %619 = vmatpush1.msra.mxu0 %v577
        %620 = vmatprep.subr.mxu0 0.0
        %621 = vmatpush2.msra.mxu0 0.0
        %622 = vmatprep.subr.mxu0 0.0
        %623 = vmatpush2.msra.mxu0 0.0
        %624 = vmatprep.subr.mxu0 0.0
        %625 = vmatpush2.msra.mxu0 0.0
        %626 = vmatprep.subr.mxu0 0.0
        %627 = vmatpush2.msra.mxu0 0.0
        %628 = vmatprep.subr.mxu0 0.0
        %629 = vmatpush2.msra.mxu0 0.0
        %630 = vmatprep.subr.mxu0 0.0
        %631 = vmatpush2.msra.mxu0 0.0
        %632 = vmatprep.subr.mxu0 0.0
        %633 = vmatpush2.msra.mxu0 0.0
        %634 = vmatprep.subr.mxu0 0.0
        %635 = vmatpush2.msra.mxu0 0.0
        %636 = vmatprep.subr.mxu0 0.0
        %637 = vmatpush2.msra.mxu0 0.0
        %638 = vmatprep.subr.mxu0 0.0
        %639 = vmatpush2.msra.mxu0 0.0
        %640 = vmatprep.subr.mxu0 0.0
        %641 = vmatpush2.msra.mxu0 0.0
        %642 = vmatprep.subr.mxu0 0.0
        %643 = vmatpush2.msra.mxu0 0.0
        %644 = vmatprep.subr.mxu0 0.0
        %645 = vmatpush2.msra.mxu0 0.0
        %646 = vmatprep.subr.mxu0 0.0
        %647 = vmatpush2.msra.mxu0 0.0
        %648 = vmatprep.subr.mxu0 0.0
        %649 = vmatpush2.msra.mxu0 0.0
        %650 = vmatprep.subr.mxu0 0.0
        %651 = vmatpush2.msra.mxu0 0.0
        %652 = vmatprep.mubr.f32.mxu0 0.0
        %653 = vmatmul.mubr.f32.gmra.mxu0 %v583
        %v654 = vpop.f32.mrf.mxu0
        %v655 = vadd.f32 0.0, %v654
        %v656 = vpop.f32.mrf.mxu0
        %657 = vmatprep.mubr.f32.mxu0 0.0
        %658 = vmatmul.mubr.f32.gmra.mxu0 %v586
        %v659 = vpop.f32.mrf.mxu0
        %v660 = vadd.f32 0.0, %v659
        %v661 = vpop.f32.mrf.mxu0
        %662 = vdwg.mxu0
        %v663 = vrcp.pop %v572
        %v664 = vrcp.pop %v575
        %v665 = vmul.f32 %v655, %v663
        %v666 = vmul.f32 %v660, %v664
        %667 = vst.msk [vmem:[#allocation4] sm:$0xff] %vm469, %v665
        %668 = vst.msk [vmem:[#allocation4 + $0x8] sm:$0xff] %vm469, %v666
        %v669 = vld [vmem:[#allocation3] sm:$0xff]
        %v670 = vld [vmem:[#allocation3 + $0x8] sm:$0xff]
        %v671 = vld [vmem:[#allocation2] sm:$0xff]
        %v672 = vld [vmem:[#allocation2 + $0x8] sm:$0xff]
        %675 = vrot.lane.b32.xlu0 %v669, 120
        %v676 = vpop.permute.xlu0 %675
        %677 = vrot.lane.b32.xlu0 %v670, 120
        %v678 = vpop.permute.xlu0 %677
        %681 = vrot.lane.b32.xlu0 %v671, 120
        %v682 = vpop.permute.xlu0 %681
        %683 = vrot.lane.b32.xlu0 %v672, 120
        %v684 = vpop.permute.xlu0 %683
        %v685 = vsel %vm469, %v676, 0
        %v687 = vsel %vm469, %v678, 0
        %v689 = vsel %vm469, %v682, 0
        %v691 = vsel %vm469, %v684, 0
        %693 = vmatprep.subr.mxu0 0.0
        %694 = vmatpush1.xpose.msra.mxu0 0.0
        %695 = vmatprep.subr.mxu0 0.0
        %696 = vmatpush1.xpose.msra.mxu0 0.0
        %697 = vmatprep.subr.mxu0 0.0
        %698 = vmatpush1.xpose.msra.mxu0 0.0
        %699 = vmatprep.subr.mxu0 0.0
        %700 = vmatpush1.xpose.msra.mxu0 0.0
        %701 = vmatprep.subr.mxu0 0.0
        %702 = vmatpush1.xpose.msra.mxu0 0.0
        %703 = vmatprep.subr.mxu0 0.0
        %704 = vmatpush1.xpose.msra.mxu0 0.0
        %705 = vmatprep.subr.mxu0 0.0
        %706 = vmatpush1.xpose.msra.mxu0 0.0
        %707 = vmatprep.subr.mxu0 0.0
        %708 = vmatpush1.xpose.msra.mxu0 0.0
        %709 = vmatprep.subr.mxu0 0.0
        %710 = vmatpush1.xpose.msra.mxu0 0.0
        %711 = vmatprep.subr.mxu0 0.0
        %712 = vmatpush1.xpose.msra.mxu0 0.0
        %713 = vmatprep.subr.mxu0 0.0
        %714 = vmatpush1.xpose.msra.mxu0 0.0
        %715 = vmatprep.subr.mxu0 0.0
        %716 = vmatpush1.xpose.msra.mxu0 0.0
        %717 = vmatprep.subr.mxu0 0.0
        %718 = vmatpush1.xpose.msra.mxu0 0.0
        %719 = vmatprep.subr.mxu0 0.0
        %720 = vmatpush1.xpose.msra.mxu0 0.0
        %721 = vmatprep.subr.mxu0 0.0
        %722 = vmatpush1.xpose.msra.mxu0 %v691
        %723 = vmatprep.subr.mxu0 0.0
        %724 = vmatpush1.xpose.msra.mxu0 %v689
        %725 = vmatprep.subr.mxu0 0.0
        %726 = vmatpush2.xpose.msra.mxu0 0.0
        %727 = vmatprep.subr.mxu0 0.0
        %728 = vmatpush2.xpose.msra.mxu0 0.0
        %729 = vmatprep.subr.mxu0 0.0
        %730 = vmatpush2.xpose.msra.mxu0 0.0
        %731 = vmatprep.subr.mxu0 0.0
        %732 = vmatpush2.xpose.msra.mxu0 0.0
        %733 = vmatprep.subr.mxu0 0.0
        %734 = vmatpush2.xpose.msra.mxu0 0.0
        %735 = vmatprep.subr.mxu0 0.0
        %736 = vmatpush2.xpose.msra.mxu0 0.0
        %737 = vmatprep.subr.mxu0 0.0
        %738 = vmatpush2.xpose.msra.mxu0 0.0
        %739 = vmatprep.subr.mxu0 0.0
        %740 = vmatpush2.xpose.msra.mxu0 0.0
        %741 = vmatprep.subr.mxu0 0.0
        %742 = vmatpush2.xpose.msra.mxu0 0.0
        %743 = vmatprep.subr.mxu0 0.0
        %744 = vmatpush2.xpose.msra.mxu0 0.0
        %745 = vmatprep.subr.mxu0 0.0
        %746 = vmatpush2.xpose.msra.mxu0 0.0
        %747 = vmatprep.subr.mxu0 0.0
        %748 = vmatpush2.xpose.msra.mxu0 0.0
        %749 = vmatprep.subr.mxu0 0.0
        %750 = vmatpush2.xpose.msra.mxu0 0.0
        %751 = vmatprep.subr.mxu0 0.0
        %752 = vmatpush2.xpose.msra.mxu0 0.0
        %753 = vmatprep.subr.mxu0 0.0
        %754 = vmatpush2.xpose.msra.mxu0 0.0
        %755 = vmatprep.subr.mxu0 0.0
        %756 = vmatpush2.xpose.msra.mxu0 0.0
        %757 = vmatprep.mubr.f32.mxu0 0.0
        %758 = vmatmul.mubr.f32.gmra.mxu0 %v685
        %v759 = vpop.f32.mrf.mxu0
        %v760 = vadd.f32 0.0, %v759
        %v761 = vpop.f32.mrf.mxu0
        %762 = vmatprep.mubr.f32.mxu0 0.0
        %763 = vmatmul.mubr.f32.gmra.mxu0 %v687
        %v764 = vpop.f32.mrf.mxu0
        %v765 = vadd.f32 0.0, %v764
        %v766 = vpop.f32.mrf.mxu0
        %767 = vdwg.mxu0
        %v768 = vsel %vm557, %v760, -inf
        %769 = vmax.xlane.f32.xlu0 %v768
        %v770 = vpop.xlane.xlu0 %769
        %v771 = vsel %vm557, %v765, -inf
        %772 = vmax.xlane.f32.xlu0 %v771
        %v773 = vpop.xlane.xlu0 %772
        %v774 = vsub.f32 %v760, %v770
        %v775 = vsub.f32 %v765, %v773
        %v776 = vmul.f32 %v774, 1.442695
        %v777 = vpow.pop %v776
        %v778 = vmul.f32 %v775, 1.442695
        %v779 = vpow.pop %v778
        %v780 = vsel %vm557, %v777, 0.0
        %781 = vadd.xlane.f32.xlu0 %v780
        %v782 = vpop.xlane.xlu0 %781
        %v783 = vsel %vm557, %v779, 0.0
        %784 = vadd.xlane.f32.xlu0 %v783
        %v785 = vpop.xlane.xlu0 %784
        %786 = vrot.lane.b32.xlu0 %v671, 88
        %v787 = vpop.permute.xlu0 %786
        %788 = vrot.lane.b32.xlu0 %v672, 88
        %v789 = vpop.permute.xlu0 %788
        %v793 = vsel %vm557, %v777, 0
        %v796 = vsel %vm557, %v779, 0
        %798 = vmatprep.subr.mxu0 0.0
        %799 = vmatpush1.msra.mxu0 0.0
        %800 = vmatprep.subr.mxu0 0.0
        %801 = vmatpush1.msra.mxu0 0.0
        %802 = vmatprep.subr.mxu0 0.0
        %803 = vmatpush1.msra.mxu0 0.0
        %804 = vmatprep.subr.mxu0 0.0
        %805 = vmatpush1.msra.mxu0 0.0
        %806 = vmatprep.subr.mxu0 0.0
        %807 = vmatpush1.msra.mxu0 0.0
        %808 = vmatprep.subr.mxu0 0.0
        %809 = vmatpush1.msra.mxu0 0.0
        %810 = vmatprep.subr.mxu0 0.0
        %811 = vmatpush1.msra.mxu0 0.0
        %812 = vmatprep.subr.mxu0 0.0
        %813 = vmatpush1.msra.mxu0 0.0
        %814 = vmatprep.subr.mxu0 0.0
        %815 = vmatpush1.msra.mxu0 0.0
        %816 = vmatprep.subr.mxu0 0.0
        %817 = vmatpush1.msra.mxu0 0.0
        %818 = vmatprep.subr.mxu0 0.0
        %819 = vmatpush1.msra.mxu0 0.0
        %820 = vmatprep.subr.mxu0 0.0
        %821 = vmatpush1.msra.mxu0 0.0
        %822 = vmatprep.subr.mxu0 0.0
        %823 = vmatpush1.msra.mxu0 0.0
        %824 = vmatprep.subr.mxu0 0.0
        %825 = vmatpush1.msra.mxu0 0.0
        %826 = vmatprep.subr.mxu0 0.0
        %827 = vmatpush1.msra.mxu0 %v789
        %828 = vmatprep.subr.mxu0 0.0
        %829 = vmatpush1.msra.mxu0 %v787
        %830 = vmatprep.subr.mxu0 0.0
        %831 = vmatpush2.msra.mxu0 0.0
        %832 = vmatprep.subr.mxu0 0.0
        %833 = vmatpush2.msra.mxu0 0.0
        %834 = vmatprep.subr.mxu0 0.0
        %835 = vmatpush2.msra.mxu0 0.0
        %836 = vmatprep.subr.mxu0 0.0
        %837 = vmatpush2.msra.mxu0 0.0
        %838 = vmatprep.subr.mxu0 0.0
        %839 = vmatpush2.msra.mxu0 0.0
        %840 = vmatprep.subr.mxu0 0.0
        %841 = vmatpush2.msra.mxu0 0.0
        %842 = vmatprep.subr.mxu0 0.0
        %843 = vmatpush2.msra.mxu0 0.0
        %844 = vmatprep.subr.mxu0 0.0
        %845 = vmatpush2.msra.mxu0 0.0
        %846 = vmatprep.subr.mxu0 0.0
        %847 = vmatpush2.msra.mxu0 0.0
        %848 = vmatprep.subr.mxu0 0.0
        %849 = vmatpush2.msra.mxu0 0.0
        %850 = vmatprep.subr.mxu0 0.0
        %851 = vmatpush2.msra.mxu0 0.0
        %852 = vmatprep.subr.mxu0 0.0
        %853 = vmatpush2.msra.mxu0 0.0
        %854 = vmatprep.subr.mxu0 0.0
        %855 = vmatpush2.msra.mxu0 0.0
        %856 = vmatprep.subr.mxu0 0.0
        %857 = vmatpush2.msra.mxu0 0.0
        %858 = vmatprep.subr.mxu0 0.0
        %859 = vmatpush2.msra.mxu0 0.0
        %860 = vmatprep.subr.mxu0 0.0
        %861 = vmatpush2.msra.mxu0 0.0
        %862 = vmatprep.mubr.f32.mxu0 0.0
        %863 = vmatmul.mubr.f32.gmra.mxu0 %v793
        %v864 = vpop.f32.mrf.mxu0
        %v865 = vadd.f32 0.0, %v864
        %v866 = vpop.f32.mrf.mxu0
        %867 = vmatprep.mubr.f32.mxu0 0.0
        %868 = vmatmul.mubr.f32.gmra.mxu0 %v796
        %v869 = vpop.f32.mrf.mxu0
        %v870 = vadd.f32 0.0, %v869
        %v871 = vpop.f32.mrf.mxu0
        %872 = vdwg.mxu0
        %v873 = vrcp.pop %v782
        %v874 = vrcp.pop %v785
        %v875 = vmul.f32 %v865, %v873
        %v876 = vmul.f32 %v870, %v874
        %879 = vrot.lane.b32.xlu0 %v875, 8
        %v880 = vpop.permute.xlu0 %879
        %881 = vrot.lane.b32.xlu0 %v876, 8
        %v882 = vpop.permute.xlu0 %881
        %vm885 = vcmask 130112
        %886 = vst.msk [vmem:[#allocation4] sm:$0xff] %vm885, %v880
        %887 = vst.msk [vmem:[#allocation4 + $0x8] sm:$0xff] %vm885, %v882
        %v888 = vld [vmem:[#allocation3] sm:$0xff]
        %v889 = vld [vmem:[#allocation3 + $0x8] sm:$0xff]
        %v890 = vld [vmem:[#allocation2] sm:$0xff]
        %v891 = vld [vmem:[#allocation2 + $0x8] sm:$0xff]
        %894 = vrot.lane.b32.xlu0 %v888, 112
        %v895 = vpop.permute.xlu0 %894
        %896 = vrot.lane.b32.xlu0 %v889, 112
        %v897 = vpop.permute.xlu0 %896
        %900 = vrot.lane.b32.xlu0 %v890, 112
        %v901 = vpop.permute.xlu0 %900
        %902 = vrot.lane.b32.xlu0 %v891, 112
        %v903 = vpop.permute.xlu0 %902
        %v904 = vsel %vm469, %v895, 0
        %v906 = vsel %vm469, %v897, 0
        %v908 = vsel %vm469, %v901, 0
        %v910 = vsel %vm469, %v903, 0
        %912 = vmatprep.subr.mxu0 0.0
        %913 = vmatpush1.xpose.msra.mxu0 0.0
        %914 = vmatprep.subr.mxu0 0.0
        %915 = vmatpush1.xpose.msra.mxu0 0.0
        %916 = vmatprep.subr.mxu0 0.0
        %917 = vmatpush1.xpose.msra.mxu0 0.0
        %918 = vmatprep.subr.mxu0 0.0
        %919 = vmatpush1.xpose.msra.mxu0 0.0
        %920 = vmatprep.subr.mxu0 0.0
        %921 = vmatpush1.xpose.msra.mxu0 0.0
        %922 = vmatprep.subr.mxu0 0.0
        %923 = vmatpush1.xpose.msra.mxu0 0.0
        %924 = vmatprep.subr.mxu0 0.0
        %925 = vmatpush1.xpose.msra.mxu0 0.0
        %926 = vmatprep.subr.mxu0 0.0
        %927 = vmatpush1.xpose.msra.mxu0 0.0
        %928 = vmatprep.subr.mxu0 0.0
        %929 = vmatpush1.xpose.msra.mxu0 0.0
        %930 = vmatprep.subr.mxu0 0.0
        %931 = vmatpush1.xpose.msra.mxu0 0.0
        %932 = vmatprep.subr.mxu0 0.0
        %933 = vmatpush1.xpose.msra.mxu0 0.0
        %934 = vmatprep.subr.mxu0 0.0
        %935 = vmatpush1.xpose.msra.mxu0 0.0
        %936 = vmatprep.subr.mxu0 0.0
        %937 = vmatpush1.xpose.msra.mxu0 0.0
        %938 = vmatprep.subr.mxu0 0.0
        %939 = vmatpush1.xpose.msra.mxu0 0.0
        %940 = vmatprep.subr.mxu0 0.0
        %941 = vmatpush1.xpose.msra.mxu0 %v910
        %942 = vmatprep.subr.mxu0 0.0
        %943 = vmatpush1.xpose.msra.mxu0 %v908
        %944 = vmatprep.subr.mxu0 0.0
        %945 = vmatpush2.xpose.msra.mxu0 0.0
        %946 = vmatprep.subr.mxu0 0.0
        %947 = vmatpush2.xpose.msra.mxu0 0.0
        %948 = vmatprep.subr.mxu0 0.0
        %949 = vmatpush2.xpose.msra.mxu0 0.0
        %950 = vmatprep.subr.mxu0 0.0
        %951 = vmatpush2.xpose.msra.mxu0 0.0
        %952 = vmatprep.subr.mxu0 0.0
        %953 = vmatpush2.xpose.msra.mxu0 0.0
        %954 = vmatprep.subr.mxu0 0.0
        %955 = vmatpush2.xpose.msra.mxu0 0.0
        %956 = vmatprep.subr.mxu0 0.0
        %957 = vmatpush2.xpose.msra.mxu0 0.0
        %958 = vmatprep.subr.mxu0 0.0
        %959 = vmatpush2.xpose.msra.mxu0 0.0
        %960 = vmatprep.subr.mxu0 0.0
        %961 = vmatpush2.xpose.msra.mxu0 0.0
        %962 = vmatprep.subr.mxu0 0.0
        %963 = vmatpush2.xpose.msra.mxu0 0.0
        %964 = vmatprep.subr.mxu0 0.0
        %965 = vmatpush2.xpose.msra.mxu0 0.0
        %966 = vmatprep.subr.mxu0 0.0
        %967 = vmatpush2.xpose.msra.mxu0 0.0
        %968 = vmatprep.subr.mxu0 0.0
        %969 = vmatpush2.xpose.msra.mxu0 0.0
        %970 = vmatprep.subr.mxu0 0.0
        %971 = vmatpush2.xpose.msra.mxu0 0.0
        %972 = vmatprep.subr.mxu0 0.0
        %973 = vmatpush2.xpose.msra.mxu0 0.0
        %974 = vmatprep.subr.mxu0 0.0
        %975 = vmatpush2.xpose.msra.mxu0 0.0
        %976 = vmatprep.mubr.f32.mxu0 0.0
        %977 = vmatmul.mubr.f32.gmra.mxu0 %v904
        %v978 = vpop.f32.mrf.mxu0
        %v979 = vadd.f32 0.0, %v978
        %v980 = vpop.f32.mrf.mxu0
        %981 = vmatprep.mubr.f32.mxu0 0.0
        %982 = vmatmul.mubr.f32.gmra.mxu0 %v906
        %v983 = vpop.f32.mrf.mxu0
        %v984 = vadd.f32 0.0, %v983
        %v985 = vpop.f32.mrf.mxu0
        %986 = vdwg.mxu0
        %v987 = vsel %vm557, %v979, -inf
        %988 = vmax.xlane.f32.xlu0 %v987
        %v989 = vpop.xlane.xlu0 %988
        %v990 = vsel %vm557, %v984, -inf
        %991 = vmax.xlane.f32.xlu0 %v990
        %v992 = vpop.xlane.xlu0 %991
        %v993 = vsub.f32 %v979, %v989
        %v994 = vsub.f32 %v984, %v992
        %v995 = vmul.f32 %v993, 1.442695
        %v996 = vpow.pop %v995
        %v997 = vmul.f32 %v994, 1.442695
        %v998 = vpow.pop %v997
        %v999 = vsel %vm557, %v996, 0.0
        %1000 = vadd.xlane.f32.xlu0 %v999
        %v1001 = vpop.xlane.xlu0 %1000
        %v1002 = vsel %vm557, %v998, 0.0
        %1003 = vadd.xlane.f32.xlu0 %v1002
        %v1004 = vpop.xlane.xlu0 %1003
        %1005 = vrot.lane.b32.xlu0 %v890, 80
        %v1006 = vpop.permute.xlu0 %1005
        %1007 = vrot.lane.b32.xlu0 %v891, 80
        %v1008 = vpop.permute.xlu0 %1007
        %v1012 = vsel %vm557, %v996, 0
        %v1015 = vsel %vm557, %v998, 0
        %1017 = vmatprep.subr.mxu0 0.0
        %1018 = vmatpush1.msra.mxu0 0.0
        %1019 = vmatprep.subr.mxu0 0.0
        %1020 = vmatpush1.msra.mxu0 0.0
        %1021 = vmatprep.subr.mxu0 0.0
        %1022 = vmatpush1.msra.mxu0 0.0
        %1023 = vmatprep.subr.mxu0 0.0
        %1024 = vmatpush1.msra.mxu0 0.0
        %1025 = vmatprep.subr.mxu0 0.0
        %1026 = vmatpush1.msra.mxu0 0.0
        %1027 = vmatprep.subr.mxu0 0.0
        %1028 = vmatpush1.msra.mxu0 0.0
        %1029 = vmatprep.subr.mxu0 0.0
        %1030 = vmatpush1.msra.mxu0 0.0
        %1031 = vmatprep.subr.mxu0 0.0
        %1032 = vmatpush1.msra.mxu0 0.0
        %1033 = vmatprep.subr.mxu0 0.0
        %1034 = vmatpush1.msra.mxu0 0.0
        %1035 = vmatprep.subr.mxu0 0.0
        %1036 = vmatpush1.msra.mxu0 0.0
        %1037 = vmatprep.subr.mxu0 0.0
        %1038 = vmatpush1.msra.mxu0 0.0
        %1039 = vmatprep.subr.mxu0 0.0
        %1040 = vmatpush1.msra.mxu0 0.0
        %1041 = vmatprep.subr.mxu0 0.0
        %1042 = vmatpush1.msra.mxu0 0.0
        %1043 = vmatprep.subr.mxu0 0.0
        %1044 = vmatpush1.msra.mxu0 0.0
        %1045 = vmatprep.subr.mxu0 0.0
        %1046 = vmatpush1.msra.mxu0 %v1008
        %1047 = vmatprep.subr.mxu0 0.0
        %1048 = vmatpush1.msra.mxu0 %v1006
        %1049 = vmatprep.subr.mxu0 0.0
        %1050 = vmatpush2.msra.mxu0 0.0
        %1051 = vmatprep.subr.mxu0 0.0
        %1052 = vmatpush2.msra.mxu0 0.0
        %1053 = vmatprep.subr.mxu0 0.0
        %1054 = vmatpush2.msra.mxu0 0.0
        %1055 = vmatprep.subr.mxu0 0.0
        %1056 = vmatpush2.msra.mxu0 0.0
        %1057 = vmatprep.subr.mxu0 0.0
        %1058 = vmatpush2.msra.mxu0 0.0
        %1059 = vmatprep.subr.mxu0 0.0
        %1060 = vmatpush2.msra.mxu0 0.0
        %1061 = vmatprep.subr.mxu0 0.0
        %1062 = vmatpush2.msra.mxu0 0.0
        %1063 = vmatprep.subr.mxu0 0.0
        %1064 = vmatpush2.msra.mxu0 0.0
        %1065 = vmatprep.subr.mxu0 0.0
        %1066 = vmatpush2.msra.mxu0 0.0
        %1067 = vmatprep.subr.mxu0 0.0
        %1068 = vmatpush2.msra.mxu0 0.0
        %1069 = vmatprep.subr.mxu0 0.0
        %1070 = vmatpush2.msra.mxu0 0.0
        %1071 = vmatprep.subr.mxu0 0.0
        %1072 = vmatpush2.msra.mxu0 0.0
        %1073 = vmatprep.subr.mxu0 0.0
        %1074 = vmatpush2.msra.mxu0 0.0
        %1075 = vmatprep.subr.mxu0 0.0
        %1076 = vmatpush2.msra.mxu0 0.0
        %1077 = vmatprep.subr.mxu0 0.0
        %1078 = vmatpush2.msra.mxu0 0.0
        %1079 = vmatprep.subr.mxu0 0.0
        %1080 = vmatpush2.msra.mxu0 0.0
        %1081 = vmatprep.mubr.f32.mxu0 0.0
        %1082 = vmatmul.mubr.f32.gmra.mxu0 %v1012
        %v1083 = vpop.f32.mrf.mxu0
        %v1084 = vadd.f32 0.0, %v1083
        %v1085 = vpop.f32.mrf.mxu0
        %1086 = vmatprep.mubr.f32.mxu0 0.0
        %1087 = vmatmul.mubr.f32.gmra.mxu0 %v1015
        %v1088 = vpop.f32.mrf.mxu0
        %v1089 = vadd.f32 0.0, %v1088
        %v1090 = vpop.f32.mrf.mxu0
        %1091 = vdwg.mxu0
        %v1092 = vrcp.pop %v1001
        %v1093 = vrcp.pop %v1004
        %v1094 = vmul.f32 %v1084, %v1092
        %v1095 = vmul.f32 %v1089, %v1093
        %1098 = vrot.lane.b32.xlu0 %v1094, 16
        %v1099 = vpop.permute.xlu0 %1098
        %1100 = vrot.lane.b32.xlu0 %v1095, 16
        %v1101 = vpop.permute.xlu0 %1100
        %vm1104 = vcmask 195712
        %1105 = vst.msk [vmem:[#allocation4] sm:$0xff] %vm1104, %v1099
        %1106 = vst.msk [vmem:[#allocation4 + $0x8] sm:$0xff] %vm1104, %v1101
        %v1107 = vld [vmem:[#allocation3] sm:$0xff]
        %v1108 = vld [vmem:[#allocation3 + $0x8] sm:$0xff]
        %v1109 = vld [vmem:[#allocation2] sm:$0xff]
        %v1110 = vld [vmem:[#allocation2 + $0x8] sm:$0xff]
        %1113 = vrot.lane.b32.xlu0 %v1107, 104
        %v1114 = vpop.permute.xlu0 %1113
        %1115 = vrot.lane.b32.xlu0 %v1108, 104
        %v1116 = vpop.permute.xlu0 %1115
        %1119 = vrot.lane.b32.xlu0 %v1109, 104
        %v1120 = vpop.permute.xlu0 %1119
        %1121 = vrot.lane.b32.xlu0 %v1110, 104
        %v1122 = vpop.permute.xlu0 %1121
        %v1123 = vsel %vm469, %v1114, 0
        %v1125 = vsel %vm469, %v1116, 0
        %v1127 = vsel %vm469, %v1120, 0
        %v1129 = vsel %vm469, %v1122, 0
        %1131 = vmatprep.subr.mxu0 0.0
        %1132 = vmatpush1.xpose.msra.mxu0 0.0
        %1133 = vmatprep.subr.mxu0 0.0
        %1134 = vmatpush1.xpose.msra.mxu0 0.0
        %1135 = vmatprep.subr.mxu0 0.0
        %1136 = vmatpush1.xpose.msra.mxu0 0.0
        %1137 = vmatprep.subr.mxu0 0.0
        %1138 = vmatpush1.xpose.msra.mxu0 0.0
        %1139 = vmatprep.subr.mxu0 0.0
        %1140 = vmatpush1.xpose.msra.mxu0 0.0
        %1141 = vmatprep.subr.mxu0 0.0
        %1142 = vmatpush1.xpose.msra.mxu0 0.0
        %1143 = vmatprep.subr.mxu0 0.0
        %1144 = vmatpush1.xpose.msra.mxu0 0.0
        %1145 = vmatprep.subr.mxu0 0.0
        %1146 = vmatpush1.xpose.msra.mxu0 0.0
        %1147 = vmatprep.subr.mxu0 0.0
        %1148 = vmatpush1.xpose.msra.mxu0 0.0
        %1149 = vmatprep.subr.mxu0 0.0
        %1150 = vmatpush1.xpose.msra.mxu0 0.0
        %1151 = vmatprep.subr.mxu0 0.0
        %1152 = vmatpush1.xpose.msra.mxu0 0.0
        %1153 = vmatprep.subr.mxu0 0.0
        %1154 = vmatpush1.xpose.msra.mxu0 0.0
        %1155 = vmatprep.subr.mxu0 0.0
        %1156 = vmatpush1.xpose.msra.mxu0 0.0
        %1157 = vmatprep.subr.mxu0 0.0
        %1158 = vmatpush1.xpose.msra.mxu0 0.0
        %1159 = vmatprep.subr.mxu0 0.0
        %1160 = vmatpush1.xpose.msra.mxu0 %v1129
        %1161 = vmatprep.subr.mxu0 0.0
        %1162 = vmatpush1.xpose.msra.mxu0 %v1127
        %1163 = vmatprep.subr.mxu0 0.0
        %1164 = vmatpush2.xpose.msra.mxu0 0.0
        %1165 = vmatprep.subr.mxu0 0.0
        %1166 = vmatpush2.xpose.msra.mxu0 0.0
        %1167 = vmatprep.subr.mxu0 0.0
        %1168 = vmatpush2.xpose.msra.mxu0 0.0
        %1169 = vmatprep.subr.mxu0 0.0
        %1170 = vmatpush2.xpose.msra.mxu0 0.0
        %1171 = vmatprep.subr.mxu0 0.0
        %1172 = vmatpush2.xpose.msra.mxu0 0.0
        %1173 = vmatprep.subr.mxu0 0.0
        %1174 = vmatpush2.xpose.msra.mxu0 0.0
        %1175 = vmatprep.subr.mxu0 0.0
        %1176 = vmatpush2.xpose.msra.mxu0 0.0
        %1177 = vmatprep.subr.mxu0 0.0
        %1178 = vmatpush2.xpose.msra.mxu0 0.0
        %1179 = vmatprep.subr.mxu0 0.0
        %1180 = vmatpush2.xpose.msra.mxu0 0.0
        %1181 = vmatprep.subr.mxu0 0.0
        %1182 = vmatpush2.xpose.msra.mxu0 0.0
        %1183 = vmatprep.subr.mxu0 0.0
        %1184 = vmatpush2.xpose.msra.mxu0 0.0
        %1185 = vmatprep.subr.mxu0 0.0
        %1186 = vmatpush2.xpose.msra.mxu0 0.0
        %1187 = vmatprep.subr.mxu0 0.0
        %1188 = vmatpush2.xpose.msra.mxu0 0.0
        %1189 = vmatprep.subr.mxu0 0.0
        %1190 = vmatpush2.xpose.msra.mxu0 0.0
        %1191 = vmatprep.subr.mxu0 0.0
        %1192 = vmatpush2.xpose.msra.mxu0 0.0
        %1193 = vmatprep.subr.mxu0 0.0
        %1194 = vmatpush2.xpose.msra.mxu0 0.0
        %1195 = vmatprep.mubr.f32.mxu0 0.0
        %1196 = vmatmul.mubr.f32.gmra.mxu0 %v1123
        %v1197 = vpop.f32.mrf.mxu0
        %v1198 = vadd.f32 0.0, %v1197
        %v1199 = vpop.f32.mrf.mxu0
        %1200 = vmatprep.mubr.f32.mxu0 0.0
        %1201 = vmatmul.mubr.f32.gmra.mxu0 %v1125
        %v1202 = vpop.f32.mrf.mxu0
        %v1203 = vadd.f32 0.0, %v1202
        %v1204 = vpop.f32.mrf.mxu0
        %1205 = vdwg.mxu0
        %v1206 = vsel %vm557, %v1198, -inf
        %1207 = vmax.xlane.f32.xlu0 %v1206
        %v1208 = vpop.xlane.xlu0 %1207
        %v1209 = vsel %vm557, %v1203, -inf
        %1210 = vmax.xlane.f32.xlu0 %v1209
        %v1211 = vpop.xlane.xlu0 %1210
        %v1212 = vsub.f32 %v1198, %v1208
        %v1213 = vsub.f32 %v1203, %v1211
        %v1214 = vmul.f32 %v1212, 1.442695
        %v1215 = vpow.pop %v1214
        %v1216 = vmul.f32 %v1213, 1.442695
        %v1217 = vpow.pop %v1216
        %v1218 = vsel %vm557, %v1215, 0.0
        %1219 = vadd.xlane.f32.xlu0 %v1218
        %v1220 = vpop.xlane.xlu0 %1219
        %v1221 = vsel %vm557, %v1217, 0.0
        %1222 = vadd.xlane.f32.xlu0 %v1221
        %v1223 = vpop.xlane.xlu0 %1222
        %1224 = vrot.lane.b32.xlu0 %v1109, 72
        %v1225 = vpop.permute.xlu0 %1224
        %1226 = vrot.lane.b32.xlu0 %v1110, 72
        %v1227 = vpop.permute.xlu0 %1226
        %v1231 = vsel %vm557, %v1215, 0
        %v1234 = vsel %vm557, %v1217, 0
        %1236 = vmatprep.subr.mxu0 0.0
        %1237 = vmatpush1.msra.mxu0 0.0
        %1238 = vmatprep.subr.mxu0 0.0
        %1239 = vmatpush1.msra.mxu0 0.0
        %1240 = vmatprep.subr.mxu0 0.0
        %1241 = vmatpush1.msra.mxu0 0.0
        %1242 = vmatprep.subr.mxu0 0.0
        %1243 = vmatpush1.msra.mxu0 0.0
        %1244 = vmatprep.subr.mxu0 0.0
        %1245 = vmatpush1.msra.mxu0 0.0
        %1246 = vmatprep.subr.mxu0 0.0
        %1247 = vmatpush1.msra.mxu0 0.0
        %1248 = vmatprep.subr.mxu0 0.0
        %1249 = vmatpush1.msra.mxu0 0.0
        %1250 = vmatprep.subr.mxu0 0.0
        %1251 = vmatpush1.msra.mxu0 0.0
        %1252 = vmatprep.subr.mxu0 0.0
        %1253 = vmatpush1.msra.mxu0 0.0
        %1254 = vmatprep.subr.mxu0 0.0
        %1255 = vmatpush1.msra.mxu0 0.0
        %1256 = vmatprep.subr.mxu0 0.0
        %1257 = vmatpush1.msra.mxu0 0.0
        %1258 = vmatprep.subr.mxu0 0.0
        %1259 = vmatpush1.msra.mxu0 0.0
        %1260 = vmatprep.subr.mxu0 0.0
        %1261 = vmatpush1.msra.mxu0 0.0
        %1262 = vmatprep.subr.mxu0 0.0
        %1263 = vmatpush1.msra.mxu0 0.0
        %1264 = vmatprep.subr.mxu0 0.0
        %1265 = vmatpush1.msra.mxu0 %v1227
        %1266 = vmatprep.subr.mxu0 0.0
        %1267 = vmatpush1.msra.mxu0 %v1225
        %1268 = vmatprep.subr.mxu0 0.0
        %1269 = vmatpush2.msra.mxu0 0.0
        %1270 = vmatprep.subr.mxu0 0.0
        %1271 = vmatpush2.msra.mxu0 0.0
        %1272 = vmatprep.subr.mxu0 0.0
        %1273 = vmatpush2.msra.mxu0 0.0
        %1274 = vmatprep.subr.mxu0 0.0
        %1275 = vmatpush2.msra.mxu0 0.0
        %1276 = vmatprep.subr.mxu0 0.0
        %1277 = vmatpush2.msra.mxu0 0.0
        %1278 = vmatprep.subr.mxu0 0.0
        %1279 = vmatpush2.msra.mxu0 0.0
        %1280 = vmatprep.subr.mxu0 0.0
        %1281 = vmatpush2.msra.mxu0 0.0
        %1282 = vmatprep.subr.mxu0 0.0
        %1283 = vmatpush2.msra.mxu0 0.0
        %1284 = vmatprep.subr.mxu0 0.0
        %1285 = vmatpush2.msra.mxu0 0.0
        %1286 = vmatprep.subr.mxu0 0.0
        %1287 = vmatpush2.msra.mxu0 0.0
        %1288 = vmatprep.subr.mxu0 0.0
        %1289 = vmatpush2.msra.mxu0 0.0
        %1290 = vmatprep.subr.mxu0 0.0
        %1291 = vmatpush2.msra.mxu0 0.0
        %1292 = vmatprep.subr.mxu0 0.0
        %1293 = vmatpush2.msra.mxu0 0.0
        %1294 = vmatprep.subr.mxu0 0.0
        %1295 = vmatpush2.msra.mxu0 0.0
        %1296 = vmatprep.subr.mxu0 0.0
        %1297 = vmatpush2.msra.mxu0 0.0
        %1298 = vmatprep.subr.mxu0 0.0
        %1299 = vmatpush2.msra.mxu0 0.0
        %1300 = vmatprep.mubr.f32.mxu0 0.0
        %1301 = vmatmul.mubr.f32.gmra.mxu0 %v1231
        %v1302 = vpop.f32.mrf.mxu0
        %v1303 = vadd.f32 0.0, %v1302
        %v1304 = vpop.f32.mrf.mxu0
        %1305 = vmatprep.mubr.f32.mxu0 0.0
        %1306 = vmatmul.mubr.f32.gmra.mxu0 %v1234
        %v1307 = vpop.f32.mrf.mxu0
        %v1308 = vadd.f32 0.0, %v1307
        %v1309 = vpop.f32.mrf.mxu0
        %1310 = vdwg.mxu0
        %v1311 = vrcp.pop %v1220
        %v1312 = vrcp.pop %v1223
        %v1313 = vmul.f32 %v1303, %v1311
        %v1314 = vmul.f32 %v1308, %v1312
        %1317 = vrot.lane.b32.xlu0 %v1313, 24
        %v1318 = vpop.permute.xlu0 %1317
        %1319 = vrot.lane.b32.xlu0 %v1314, 24
        %v1320 = vpop.permute.xlu0 %1319
        %vm1323 = vcmask 261312
        %1324 = vst.msk [vmem:[#allocation4] sm:$0xff] %vm1323, %v1318
        %1325 = vst.msk [vmem:[#allocation4 + $0x8] sm:$0xff] %vm1323, %v1320
        %v1326 = vld [vmem:[#allocation4] sm:$0xff]
        %v1327 = vld [vmem:[#allocation4 + $0x8] sm:$0xff]
        %v1328 = vld [vmem:[%s3] sm:$0xff]
        %v1329 = vld [vmem:[%s3 + $0x8] sm:$0xff]
        %v1330 = vld [vmem:[%s3 + $0x10] sm:$0xff]
        %v1331 = vld [vmem:[%s3 + $0x18] sm:$0xff]
        %v1332 = vld [vmem:[%s4] sm:$0x1]
        %v1334 = vlaneseq
        %v1335 = vshrl.u32 %v1334, 7
        %v1336 = vsub.s32 0, %v1335
        %v1337 = vrot.slane %v1332, %v1336
        %v1340 = vsel %vm369, %v1326, 0
        %v1343 = vsel %vm369, %v1327, 0
        %v1346 = vsel %vm369, %v1328, 0
        %v1349 = vsel %vm369, %v1329, 0
        %v1352 = vsel %vm369, %v1330, 0
        %v1355 = vsel %vm369, %v1331, 0
        %1357 = vmatprep.subr.mxu0 0.0
        %1358 = vmatpush1.xpose.msra.mxu0 0.0
        %1359 = vmatprep.subr.mxu0 0.0
        %1360 = vmatpush1.xpose.msra.mxu0 0.0
        %1361 = vmatprep.subr.mxu0 0.0
        %1362 = vmatpush1.xpose.msra.mxu0 0.0
        %1363 = vmatprep.subr.mxu0 0.0
        %1364 = vmatpush1.xpose.msra.mxu0 0.0
        %1365 = vmatprep.subr.mxu0 0.0
        %1366 = vmatpush1.xpose.msra.mxu0 0.0
        %1367 = vmatprep.subr.mxu0 0.0
        %1368 = vmatpush1.xpose.msra.mxu0 0.0
        %1369 = vmatprep.subr.mxu0 0.0
        %1370 = vmatpush1.xpose.msra.mxu0 0.0
        %1371 = vmatprep.subr.mxu0 0.0
        %1372 = vmatpush1.xpose.msra.mxu0 0.0
        %1373 = vmatprep.subr.mxu0 0.0
        %1374 = vmatpush1.xpose.msra.mxu0 0.0
        %1375 = vmatprep.subr.mxu0 0.0
        %1376 = vmatpush1.xpose.msra.mxu0 0.0
        %1377 = vmatprep.subr.mxu0 0.0
        %1378 = vmatpush1.xpose.msra.mxu0 0.0
        %1379 = vmatprep.subr.mxu0 0.0
        %1380 = vmatpush1.xpose.msra.mxu0 0.0
        %1381 = vmatprep.subr.mxu0 0.0
        %1382 = vmatpush1.xpose.msra.mxu0 %v1355
        %1383 = vmatprep.subr.mxu0 0.0
        %1384 = vmatpush1.xpose.msra.mxu0 %v1352
        %1385 = vmatprep.subr.mxu0 0.0
        %1386 = vmatpush1.xpose.msra.mxu0 %v1349
        %1387 = vmatprep.subr.mxu0 0.0
        %1388 = vmatpush1.xpose.msra.mxu0 %v1346
        %1389 = vmatprep.subr.mxu0 0.0
        %1390 = vmatpush2.xpose.msra.mxu0 0.0
        %1391 = vmatprep.subr.mxu0 0.0
        %1392 = vmatpush2.xpose.msra.mxu0 0.0
        %1393 = vmatprep.subr.mxu0 0.0
        %1394 = vmatpush2.xpose.msra.mxu0 0.0
        %1395 = vmatprep.subr.mxu0 0.0
        %1396 = vmatpush2.xpose.msra.mxu0 0.0
        %1397 = vmatprep.subr.mxu0 0.0
        %1398 = vmatpush2.xpose.msra.mxu0 0.0
        %1399 = vmatprep.subr.mxu0 0.0
        %1400 = vmatpush2.xpose.msra.mxu0 0.0
        %1401 = vmatprep.subr.mxu0 0.0
        %1402 = vmatpush2.xpose.msra.mxu0 0.0
        %1403 = vmatprep.subr.mxu0 0.0
        %1404 = vmatpush2.xpose.msra.mxu0 0.0
        %1405 = vmatprep.subr.mxu0 0.0
        %1406 = vmatpush2.xpose.msra.mxu0 0.0
        %1407 = vmatprep.subr.mxu0 0.0
        %1408 = vmatpush2.xpose.msra.mxu0 0.0
        %1409 = vmatprep.subr.mxu0 0.0
        %1410 = vmatpush2.xpose.msra.mxu0 0.0
        %1411 = vmatprep.subr.mxu0 0.0
        %1412 = vmatpush2.xpose.msra.mxu0 0.0
        %1413 = vmatprep.subr.mxu0 0.0
        %1414 = vmatpush2.xpose.msra.mxu0 0.0
        %1415 = vmatprep.subr.mxu0 0.0
        %1416 = vmatpush2.xpose.msra.mxu0 0.0
        %1417 = vmatprep.subr.mxu0 0.0
        %1418 = vmatpush2.xpose.msra.mxu0 0.0
        %1419 = vmatprep.subr.mxu0 0.0
        %1420 = vmatpush2.xpose.msra.mxu0 0.0
        %1421 = vmatprep.mubr.f32.mxu0 0.0
        %1422 = vmatmul.mubr.f32.gmra.mxu0 %v1340
        %v1423 = vpop.f32.mrf.mxu0
        %v1424 = vadd.f32 %v1337, %v1423
        %v1425 = vpop.f32.mrf.mxu0
        %1426 = vmatprep.mubr.f32.mxu0 0.0
        %1427 = vmatmul.mubr.f32.gmra.mxu0 %v1343
        %v1428 = vpop.f32.mrf.mxu0
        %v1429 = vadd.f32 %v1337, %v1428
        %v1430 = vpop.f32.mrf.mxu0
        %1431 = vdwg.mxu0
        %1432 = vst.msk [vmem:[%s231] sm:$0xff] %vm369, %v1424
        %1433 = vst.msk [vmem:[%s231 + $0x8] sm:$0xff] %vm369, %v1429
        %s1434 = sand.u32 %s151, 1
        %s1435 = scalar_lea.sflag [#allocation6], %s1434
        %s1436 = sand.u32 %s151, 1
        %s1437 = smul.addr %s1436, 16
        %s1438 = scalar_lea.vmem [#allocation5], %s1437
        // Predicated region
        $region45: #{tpu_custom_call.1} parent=39 // pred_check
          %p1439 = pneg %p161
        $region46: #{tpu_custom_call.1} parent=39 // pred_check_branch
          %1441 = sbr.rel (%p1439) target = $region48
        $region47: #{tpu_custom_call.1} parent=39 // pred_region
          %s1442 = smul.u32 2, %s24
          %s1444 = ssub.s32 256, 256
          %1445 = vsyncadd %s1435, %s1444
          %s1446 = smul.addr %s23, 2
          %s1447 = sadd.s32 %s1442, %s1446
          %s1448 = smul.addr %s1447, 128
          %s1449 = scalar_lea.hbm %s5, %s1448
          %s1450 = sshll.u32 %s1438, 4
          %s1451 = int_to_ptr.vmem [resolvable:$true] %s1450
          %1456 = dma.vmem_to_hbm [thread:$0]  %s1451, 256, %s1449, %s1435, 128, 128, 8
        $region48: #{tpu_custom_call.1} parent=39 // pred_fallthru
          _
      $region40: #{tpu_custom_call.1} parent=5 // pred_fallthru
        _
      %p1457 = scmp.le.s32.totalorder 2, %s14
      // Predicated region
      $region49: #{tpu_custom_call.1} parent=5 // pred_check
        %p1458 = pneg %p1457
      $region50: #{tpu_custom_call.1} parent=5 // pred_check_branch
        %1460 = sbr.rel (%p1458) target = $region52
      $region51: #{tpu_custom_call.1} parent=5 // pred_region
        %s1461 = ssub.s32 %s14, 2
        // Predicated region
        $region53: #{tpu_custom_call.1} parent=51 // pred_check
          %p1462 = pneg %p167
        $region54: #{tpu_custom_call.1} parent=51 // pred_check_branch
          %1464 = sbr.rel (%p1462) target = $region56
        $region55: #{tpu_custom_call.1} parent=51 // pred_region
          %s1465 = sand.u32 %s152, 1
          %s1466 = scalar_lea.sflag [#allocation6], %s1465
          %s1467 = sand.u32 %s152, 1
          %s1468 = smul.addr %s1467, 16
          %s1469 = scalar_lea.vmem [#allocation5], %s1468
          %1470 = dma.done %s1466, 256
        $region56: #{tpu_custom_call.1} parent=51 // pred_fallthru
          _
      $region52: #{tpu_custom_call.1} parent=5 // pred_fallthru
        _
    $region6: #{tpu_custom_call.1} parent=1 // loop_footer
      %s18 = sadd.s32 1, %s14
    $region7: #{tpu_custom_call.1} parent=1 // loop_footer_branch
      %13 = sbr.rel target = $region3
    $region8: #{tpu_custom_call.1} parent=1 // loop_exit
      _
    %1471 = vsyncpa [#allocation6], 1
    %s1472 = scalar_lea.sflag [#allocation6], 1
    %1473 = vsyncpa %s1472, 1

</llo_original>
